<compile_context>
chip_gen: v7x
topology: tpu7x:2x2x1
jax: 0.10.0
libtpu: 0.0.40
codegen_flags: <defaults>
</compile_context>

<pallas_src>
import functools

import jax
import jax.numpy as jnp
from jax.experimental import pallas as pl
from jax.experimental.pallas import tpu as pltpu

LANE = 128  # TPU lane width (minor-dim vreg extent)


def _round_up(n, m):
    return ((n + m - 1) // m) * m


def _is_pow2(n):
    return n > 0 and (n & (n - 1)) == 0


def _choose_batch_tile(batch, requested=None):
    """Pick a batch tile: large (amortize per-step overhead & DMA), a multiple
    of 8 (sublane-aligned), divides the batch exactly, and leaves >=2 grid
    steps for batches >=256 (v7x megacore; negligible cost on v5e/v6e)."""
    if requested is not None:
        cap = min(requested, batch)
    else:
        cap = min(1024, batch if batch < 256 else batch // 2)
    d = (cap // 8) * 8
    while d >= 8:
        if batch % d == 0:
            return d
        d -= 8
    # Fallback: single grid step; block shape == full array dim is always legal.
    return batch


def net2_kernel(x_ref, w1_ref, w2_ref, w3_ref, b3_ref, o_ref, *,
                map1_div, map2_div):
    bias = 3.0

    # ----- layer1 : F2C (eval path) + matmul + bias, then ReLU -----
    h = jnp.floor(x_ref[...] / 10.0) - 1.0
    h = jnp.dot(h, w1_ref[...], preferred_element_type=jnp.float32) + bias
    h = jnp.maximum(h, 0.0)

    # Mapping(input_size) floor step. Power-of-two divisor -> exact reciprocal
    # multiply on the VALU; otherwise keep the exact divide (ulp changes before
    # floor() would flip results).
    if _is_pow2(map1_div):
        h = jnp.floor(h * (1.0 / map1_div))
    else:
        h = jnp.floor(h / map1_div)
    # Fused Mapping tail + next layer's F2C:
    #   floor(((h + 5) * 10) / 10) - 1 == h + 4
    # (h is a small non-negative integer here; exact while 10*(h+5) < 2^24).
    h = h + 4.0

    # ----- layer2 : matmul + bias, ReLU -----
    h = jnp.dot(h, w2_ref[...], preferred_element_type=jnp.float32) + bias
    h = jnp.maximum(h, 0.0)
    if _is_pow2(map2_div):
        h = jnp.floor(h * (1.0 / map2_div))   # 4*512 = 2048 = 2^11 -> exact
    else:
        h = jnp.floor(h / map2_div)
    h = h + 4.0                               # fused Mapping2 tail + layer3 F2C

    # Dropout(0.2): identity under inference semantics (is_train is None).
    # TODO(synk): training-mode stochastic dropout not implemented (would use pltpu.prng_*).

    # ----- layer3 : matmul + fused bias/mask row -----
    # b3 = +3.0 on real output columns, -1e30 on zero-padded columns so they
    # vanish in the softmax (exp underflows to exactly 0).
    h = jnp.dot(h, w3_ref[...], preferred_element_type=jnp.float32) + b3_ref[...]

    # Softmax over the feature lanes.
    m = jnp.max(h, axis=1, keepdims=True)
    e = jnp.exp(h - m)
    s = jnp.sum(e, axis=1, keepdims=True)
    r = pl.reciprocal(s, approx=True)         # EUP slot (free alongside VPU)
    r = r * (2.0 - s * r)                     # one Newton step -> ~f32 accuracy
    o_ref[...] = (e * r).astype(o_ref.dtype)


def net2_forward(x, w1, w2, w3, *, batch_tile=None):
    """x: (B, input_size), w1: (input_size, L1), w2: (L1, L2), w3: (L2, out)."""
    batch, input_size = x.shape
    layer1_node = w1.shape[1]
    layer2_node = w2.shape[1]
    out_size = w3.shape[1]
    assert w1.shape[0] == input_size
    assert w2.shape[0] == layer1_node
    assert w3.shape[0] == layer2_node

    # Lane-dense zero padding of every contraction / output dim to a multiple
    # of 128. Padded activation columns are annihilated by the zero weight
    # rows that follow them, so this is correctness-preserving.
    # NOTE: ideally x (and the weights) are padded once upstream, not per call.
    in_p = _round_up(input_size, LANE)
    l1_p = _round_up(layer1_node, LANE)
    l2_p = _round_up(layer2_node, LANE)
    out_p = _round_up(out_size, LANE)

    xp = jnp.pad(x, ((0, 0), (0, in_p - input_size)))
    w1p = jnp.pad(w1, ((0, in_p - input_size), (0, l1_p - layer1_node)))
    w2p = jnp.pad(w2, ((0, l1_p - layer1_node), (0, l2_p - layer2_node)))
    w3p = jnp.pad(w3, ((0, l2_p - layer2_node), (0, out_p - out_size)))

    # Layer-3 bias/mask row (replaces in-kernel iota + compare + select).
    b3 = jnp.where(jnp.arange(out_p) < out_size, 3.0, -1e30)
    b3 = b3.astype(jnp.float32)[None, :]

    tb = _choose_batch_tile(batch, batch_tile)
    grid = (batch // tb,)

    kernel = functools.partial(
        net2_kernel,
        map1_div=4 * input_size,     # Mapping(input_size): original, unpadded
        map2_div=4 * layer1_node,    # Mapping(layer1_node): original, unpadded
    )

    flops = 2 * batch * (in_p * l1_p + l1_p * l2_p + l2_p * out_p)
    bytes_accessed = 4 * (xp.size + w1p.size + w2p.size + w3p.size + b3.size
                          + batch * out_p)
    cost = pl.CostEstimate(
        flops=flops,
        transcendentals=batch * out_p,  # exp in the softmax
        bytes_accessed=bytes_accessed,
    )

    out = pl.pallas_call(
        kernel,
        out_shape=jax.ShapeDtypeStruct((batch, out_p), jnp.float32),
        grid=grid,
        in_specs=[
            # Activations: tiled over batch (fetch tile i+1 while computing i).
            pl.BlockSpec((tb, in_p), lambda i: (i, 0)),
            # Weights + bias row: constant block index -> VMEM-resident.
            pl.BlockSpec((in_p, l1_p), lambda i: (0, 0)),
            pl.BlockSpec((l1_p, l2_p), lambda i: (0, 0)),
            pl.BlockSpec((l2_p, out_p), lambda i: (0, 0)),
            pl.BlockSpec((1, out_p), lambda i: (0, 0)),
        ],
        out_specs=pl.BlockSpec((tb, out_p), lambda i: (i, 0)),
        compiler_params=pltpu.CompilerParams(
            dimension_semantics=("parallel",),  # megacore sharding on v7x
        ),
        cost_estimate=cost,
    )(xp, w1p, w2p, w3p, b3)

    return out[:, :out_size]


def net2_reference(x, w1, w2, w3):
    """Plain-JAX reference mirroring the PyTorch forward (eval semantics)."""
    input_size, layer1_node = w1.shape
    h = jnp.floor(x / 10.0) - 1.0
    h = h @ w1 + 3.0
    h = jnp.maximum(h, 0.0)
    h = (jnp.floor(h / (4.0 * input_size)) + 5.0) * 10.0
    h = jnp.floor(h / 10.0) - 1.0
    h = h @ w2 + 3.0
    h = jnp.maximum(h, 0.0)
    h = (jnp.floor(h / (4.0 * layer1_node)) + 5.0) * 10.0
    h = jnp.floor(h / 10.0) - 1.0
    h = h @ w3 + 3.0
    return jax.nn.softmax(h, axis=1)


if __name__ == "__main__":
    # Shapes consistent with the module's globals (input_size=100, layer1=512,
    # layer2=32, output=10); batch chosen so the auto tile gives a 2-step grid.
    BATCH, INPUT_SIZE, LAYER1, LAYER2, OUTPUT = 256, 100, 512, 32, 10

    key = jax.random.PRNGKey(0)
    kx, k1, k2, k3 = jax.random.split(key, 4)

    # Deterministic weight init mirroring torch.nn.init.uniform_(a=-3, b=3)
    w1 = jax.random.uniform(k1, (INPUT_SIZE, LAYER1), jnp.float32, -3.0, 3.0)
    w2 = jax.random.uniform(k2, (LAYER1, LAYER2), jnp.float32, -3.0, 3.0)
    w3 = jax.random.uniform(k3, (LAYER2, OUTPUT), jnp.float32, -3.0, 3.0)

    # Input "frequencies"
    x = jax.random.uniform(kx, (BATCH, INPUT_SIZE), jnp.float32, 0.0, 100.0)

    out = net2_forward(x, w1, w2, w3)
    out = jax.block_until_ready(out)

    ref = net2_reference(x, w1, w2, w3)
    assert out.shape == (BATCH, OUTPUT)
    assert jnp.allclose(out, ref, atol=1e-5, rtol=1e-5), "mismatch vs reference"

    print("KERNEL_OK")
</pallas_src>

<mosaic_0001>
module attributes {stable_mosaic.version = 11 : i64} {
  func.func @net2_kernel(%arg0: i32, %arg1: memref<128x128xf32, #tpu.memory_space<vmem>>, %arg2: memref<128x512xf32, #tpu.memory_space<vmem>>, %arg3: memref<512x128xf32, #tpu.memory_space<vmem>>, %arg4: memref<128x128xf32, #tpu.memory_space<vmem>>, %arg5: memref<1x128xf32, #tpu.memory_space<vmem>>, %arg6: memref<128x128xf32, #tpu.memory_space<vmem>>) attributes {dimension_semantics = [#tpu.dimension_semantics<parallel>], iteration_bounds = array<i64: 2>, scalar_prefetch = 0 : i64, scratch_operands = 0 : i64, tpu.core_type = #tpu.core_type<tc>, window_params = [{transform_indices = @transform_0, window_bounds = array<i64: 128, 128>}, {pipeline_mode = #tpu.pipeline_mode<synchronous>, transform_indices = @transform_1, window_bounds = array<i64: 128, 512>}, {pipeline_mode = #tpu.pipeline_mode<synchronous>, transform_indices = @transform_2, window_bounds = array<i64: 512, 128>}, {pipeline_mode = #tpu.pipeline_mode<synchronous>, transform_indices = @transform_3, window_bounds = array<i64: 128, 128>}, {pipeline_mode = #tpu.pipeline_mode<synchronous>, transform_indices = @transform_4, window_bounds = array<i64: 1, 128>}, {transform_indices = @transform_5, window_bounds = array<i64: 128, 128>}]} {
    %c0 = arith.constant 0 : index
    %c0_0 = arith.constant 0 : index
    %0 = vector.load %arg1[%c0, %c0_0] : memref<128x128xf32, #tpu.memory_space<vmem>>, vector<128x128xf32>
    %cst = arith.constant 1.000000e+01 : f32
    %1 = vector.broadcast %cst : f32 to vector<128x128xf32>
    %2 = arith.divf %0, %1 : vector<128x128xf32>
    %3 = math.floor %2 : vector<128x128xf32>
    %cst_1 = arith.constant 1.000000e+00 : f32
    %4 = vector.broadcast %cst_1 : f32 to vector<128x128xf32>
    %5 = arith.subf %3, %4 : vector<128x128xf32>
    %c0_2 = arith.constant 0 : index
    %c0_3 = arith.constant 0 : index
    %6 = vector.load %arg2[%c0_2, %c0_3] : memref<128x512xf32, #tpu.memory_space<vmem>>, vector<128x512xf32>
    %cst_4 = arith.constant dense<0.000000e+00> : vector<128x512xf32>
    %7 = tpu.matmul %5, %6, %cst_4 {dimension_numbers = #tpu.dot_dimension_numbers<[1], [0], [0], [1], [0, 0, 1, 1], [], []>} : vector<128x128xf32>, vector<128x512xf32>, vector<128x512xf32> -> vector<128x512xf32>
    %cst_5 = arith.constant 3.000000e+00 : f32
    %8 = vector.broadcast %cst_5 : f32 to vector<128x512xf32>
    %9 = arith.addf %7, %8 : vector<128x512xf32>
    %cst_6 = arith.constant 0.000000e+00 : f32
    %10 = vector.broadcast %cst_6 : f32 to vector<128x512xf32>
    %11 = arith.maximumf %9, %10 : vector<128x512xf32>
    %cst_7 = arith.constant 4.000000e+02 : f32
    %12 = vector.broadcast %cst_7 : f32 to vector<128x512xf32>
    %13 = arith.divf %11, %12 : vector<128x512xf32>
    %14 = math.floor %13 : vector<128x512xf32>
    %cst_8 = arith.constant 4.000000e+00 : f32
    %15 = vector.broadcast %cst_8 : f32 to vector<128x512xf32>
    %16 = arith.addf %14, %15 : vector<128x512xf32>
    %c0_9 = arith.constant 0 : index
    %c0_10 = arith.constant 0 : index
    %17 = vector.load %arg3[%c0_9, %c0_10] : memref<512x128xf32, #tpu.memory_space<vmem>>, vector<512x128xf32>
    %cst_11 = arith.constant dense<0.000000e+00> : vector<128x128xf32>
    %18 = tpu.matmul %16, %17, %cst_11 {dimension_numbers = #tpu.dot_dimension_numbers<[1], [0], [0], [1], [0, 0, 1, 1], [], []>} : vector<128x512xf32>, vector<512x128xf32>, vector<128x128xf32> -> vector<128x128xf32>
    %cst_12 = arith.constant 3.000000e+00 : f32
    %19 = vector.broadcast %cst_12 : f32 to vector<128x128xf32>
    %20 = arith.addf %18, %19 : vector<128x128xf32>
    %cst_13 = arith.constant 0.000000e+00 : f32
    %21 = vector.broadcast %cst_13 : f32 to vector<128x128xf32>
    %22 = arith.maximumf %20, %21 : vector<128x128xf32>
    %cst_14 = arith.constant 4.8828125E-4 : f32
    %23 = vector.broadcast %cst_14 : f32 to vector<128x128xf32>
    %24 = arith.mulf %22, %23 : vector<128x128xf32>
    %25 = math.floor %24 : vector<128x128xf32>
    %cst_15 = arith.constant 4.000000e+00 : f32
    %26 = vector.broadcast %cst_15 : f32 to vector<128x128xf32>
    %27 = arith.addf %25, %26 : vector<128x128xf32>
    %c0_16 = arith.constant 0 : index
    %c0_17 = arith.constant 0 : index
    %28 = vector.load %arg4[%c0_16, %c0_17] : memref<128x128xf32, #tpu.memory_space<vmem>>, vector<128x128xf32>
    %cst_18 = arith.constant dense<0.000000e+00> : vector<128x128xf32>
    %29 = tpu.matmul %27, %28, %cst_18 {dimension_numbers = #tpu.dot_dimension_numbers<[1], [0], [0], [1], [0, 0, 1, 1], [], []>} : vector<128x128xf32>, vector<128x128xf32>, vector<128x128xf32> -> vector<128x128xf32>
    %c0_19 = arith.constant 0 : index
    %c0_20 = arith.constant 0 : index
    %30 = vector.load %arg5[%c0_19, %c0_20] : memref<1x128xf32, #tpu.memory_space<vmem>>, vector<1x128xf32>
    %31 = vector.broadcast %30 : vector<1x128xf32> to vector<128x128xf32>
    %32 = arith.addf %29, %31 : vector<128x128xf32>
    %cst_21 = arith.constant dense<0xFF800000> : vector<128xf32>
    %33 = vector.multi_reduction <maximumf>, %32, %cst_21 [1] : vector<128x128xf32> to vector<128xf32>
    %34 = vector.shape_cast %33 : vector<128xf32> to vector<128x1xf32>
    %35 = vector.broadcast %34 : vector<128x1xf32> to vector<128x128xf32>
    %36 = arith.subf %32, %35 : vector<128x128xf32>
    %37 = math.exp %36 : vector<128x128xf32>
    %cst_22 = arith.constant dense<0.000000e+00> : vector<128xf32>
    %38 = vector.multi_reduction <add>, %37, %cst_22 [1] : vector<128x128xf32> to vector<128xf32>
    %39 = vector.shape_cast %38 : vector<128xf32> to vector<128x1xf32>
    %40 = tpu.reciprocal %39 {approx = true} : vector<128x1xf32> -> vector<128x1xf32>
    %41 = arith.mulf %39, %40 : vector<128x1xf32>
    %cst_23 = arith.constant 2.000000e+00 : f32
    %42 = vector.broadcast %cst_23 : f32 to vector<128x1xf32>
    %43 = arith.subf %42, %41 : vector<128x1xf32>
    %44 = arith.mulf %40, %43 : vector<128x1xf32>
    %45 = vector.broadcast %44 : vector<128x1xf32> to vector<128x128xf32>
    %46 = arith.mulf %37, %45 : vector<128x128xf32>
    %c0_24 = arith.constant 0 : index
    %c0_25 = arith.constant 0 : index
    %47 = vector.load %arg6[%c0_24, %c0_25] : memref<128x128xf32, #tpu.memory_space<vmem>>, vector<128x128xf32>
    tpu.vector_store %arg6[%c0_24, %c0_25], %46 {strides = array<i32>} : memref<128x128xf32, #tpu.memory_space<vmem>>, vector<128x128xf32>,
    return
  }
  func.func @transform_0(%arg0: i32) -> (i32, i32) {
    %c0_i32 = arith.constant 0 : i32
    %c0_i32_0 = arith.constant 0 : i32
    return %arg0, %c0_i32 : i32, i32
  }
  func.func @transform_1(%arg0: i32) -> (i32, i32) {
    %c0_i32 = arith.constant 0 : i32
    %c0_i32_0 = arith.constant 0 : i32
    %c0_i32_1 = arith.constant 0 : i32
    return %c0_i32, %c0_i32_0 : i32, i32
  }
  func.func @transform_2(%arg0: i32) -> (i32, i32) {
    %c0_i32 = arith.constant 0 : i32
    %c0_i32_0 = arith.constant 0 : i32
    %c0_i32_1 = arith.constant 0 : i32
    return %c0_i32, %c0_i32_0 : i32, i32
  }
  func.func @transform_3(%arg0: i32) -> (i32, i32) {
    %c0_i32 = arith.constant 0 : i32
    %c0_i32_0 = arith.constant 0 : i32
    %c0_i32_1 = arith.constant 0 : i32
    return %c0_i32, %c0_i32_0 : i32, i32
  }
  func.func @transform_4(%arg0: i32) -> (i32, i32) {
    %c0_i32 = arith.constant 0 : i32
    %c0_i32_0 = arith.constant 0 : i32
    %c0_i32_1 = arith.constant 0 : i32
    return %c0_i32, %c0_i32_0 : i32, i32
  }
  func.func @transform_5(%arg0: i32) -> (i32, i32) {
    %c0_i32 = arith.constant 0 : i32
    %c0_i32_0 = arith.constant 0 : i32
    return %arg0, %c0_i32 : i32, i32
  }
}

</mosaic_0001>

<llo_original>
// kernel: tpu_custom_call.1
$region0: #{tpu_custom_call.1}
  #allocation0 [shape = 'u32[]', space=smem, size = 0x4, offset = 0x4, fixed_abs, tag = 'smem constant byte address 0x4 - core index']
  #allocation1 [shape = 'u32[144,128]{1,0:T(1,128)}', space=vmem, size = 0x12000, scoped, tag = 'internal scratch']
  %s0 = inlined_call_operand.hbm [shape: f32[256,128], index: 0, kind: input, shape index: {}]
  %s1 = inlined_call_operand.hbm [shape: f32[128,512], index: 1, kind: input, shape index: {}]
  %s2 = inlined_call_operand.hbm [shape: f32[512,128], index: 2, kind: input, shape index: {}]
  %s3 = inlined_call_operand.hbm [shape: f32[128,128], index: 3, kind: input, shape index: {}]
  %s4 = inlined_call_operand.vmem [shape: f32[1,128], index: 4, kind: input, shape index: {}]
  %s5 = inlined_call_operand.hbm [shape: f32[256,128], index: 5, kind: output, shape index: {}]
  %s6 = sld [smem:[#allocation0]]
  $region69: #{tpu_custom_call.1} parent=0
    _
  %s8 = ssub.s32 1, %s6
  %s9 = scalar_select 0, %s8, %s6
  $region1: #{tpu_custom_call.1} parent=0
    #allocation2 [shape = 'u8[131072]{0}', space=vmem, size = 0x20000, scoped, tag = 'input window, operand 0']
    #allocation3 [shape = 's32[2]{0}', space=sflag, size = 0x8, scoped, tag = 'scoped memory for tpu_custom_call.1']
    #allocation4 [shape = 's32[2]{0}', space=sflag, size = 0x8, scoped, tag = 'scoped memory for tpu_custom_call.1']
    #allocation5 [shape = 'u8[262144]{0}', space=vmem, size = 0x40000, scoped, tag = 'input window, operand 1, single buffered']
    #allocation6 [shape = 's32[1]{0}', space=sflag, size = 0x4, scoped, tag = 'scoped memory for tpu_custom_call.1']
    #allocation7 [shape = 'u8[262144]{0}', space=vmem, size = 0x40000, scoped, tag = 'input window, operand 2, single buffered']
    #allocation8 [shape = 'u8[65536]{0}', space=vmem, size = 0x10000, scoped, tag = 'input window, operand 3, single buffered']
    #allocation9 [shape = 's32[1]{0}', space=sflag, size = 0x4, scoped, tag = 'scoped memory for tpu_custom_call.1']
    #allocation10 [shape = 'u8[131072]{0}', space=vmem, size = 0x20000, scoped, tag = 'output window, operand 0']
    %10 = vsyncpa [#allocation3], 0
    %s11 = scalar_lea.sflag [#allocation3], 1
    %12 = vsyncpa %s11, 0
    %13 = vsyncpa [#allocation6], 0
    %14 = vsyncpa [#allocation9], 0
    %15 = vsyncpa [#allocation4], 0
    %s16 = scalar_lea.sflag [#allocation4], 1
    %17 = vsyncpa %s16, 0
    loop: start=0, step=1, limit=4
    $region2: #{tpu_custom_call.1} parent=1 // loop_pre_header
      _
    $region3: #{tpu_custom_call.1} parent=1 // loop_header
      %s19 = sphi 0, %s23
      %p20 = scmp.ge.s32.totalorder %s19, 4
      %s29 = sphi 0, %s31
      %s32 = sphi 0, %s29
      %s33 = sphi 0, %s32
      %s49 = sphi 0, %s33
      %s53 = sphi 0, %s53
      %s55 = sphi 0, %s53
      %s56 = sphi 0, %s55
      %s70 = sphi 0, %s56
      %s74 = sphi 0, %s74
      %s76 = sphi 0, %s74
      %s77 = sphi 0, %s76
      %s91 = sphi 0, %s77
      %s95 = sphi 0, %s95
      %s97 = sphi 0, %s95
      %s98 = sphi 0, %s97
      %s112 = sphi 0, %s98
      %s116 = sphi 0, %s116
      %s118 = sphi 0, %s116
      %s119 = sphi 0, %s118
      %s133 = sphi 0, %s119
      %s139 = sphi 0, %s141
      %s142 = sphi 0, %s139
      %s143 = sphi 0, %s142
      %s159 = sphi 0, %s143
    $region4: #{tpu_custom_call.1} parent=1 // loop_header_branch
      %22 = sbr.rel (%p20) target = $region8
    $region5: #{tpu_custom_call.1} parent=1 // loop_body
      %s24 = ssub.s32 %s19, 1
      %s25 = ssub.s32 %s19, 2
      %s26 = sadd.s32 %s19, 1
      %s27 = ssub.s32 %s19, %s26
      %p28 = scmp.eq.s32.totalorder %s27, 0
      %s30 = sadd.s32 %s29, 1
      %s31 = scalar_select %p28, %s29, %s30
      %p34 = pneg %p28
      %p35 = scmp.eq.s32.totalorder %s19, 1
      %p36 = por %p34, %p35
      %p37 = scmp.ne.s32.totalorder %s29, %s32
      %p38 = scmp.eq.s32.totalorder %s19, 0
      %p39 = por %p37, %p38
      %p40 = scmp.ne.s32.totalorder %s29, %s32
      %p41 = scmp.eq.s32.totalorder %s24, 1
      %p42 = por %p40, %p41
      %p43 = scmp.ne.s32.totalorder %s32, %s33
      %p44 = scmp.eq.s32.totalorder %s24, 0
      %p45 = por %p43, %p44
      %p46 = scmp.ne.s32.totalorder %s32, %s33
      %p47 = scmp.eq.s32.totalorder %s25, 1
      %p48 = por %p46, %p47
      %p50 = scmp.ne.s32.totalorder %s33, %s49
      %p51 = scmp.eq.s32.totalorder %s25, 0
      %p52 = por %p50, %p51
      %s54 = sadd.s32 %s53, 1
      %p57 = scmp.eq.s32.totalorder %s19, 1
      %p58 = scmp.ne.s32.totalorder %s53, %s55
      %p59 = scmp.eq.s32.totalorder %s19, 0
      %p60 = por %p58, %p59
      %p61 = scmp.ne.s32.totalorder %s53, %s55
      %p62 = scmp.eq.s32.totalorder %s24, 1
      %p63 = por %p61, %p62
      %p64 = scmp.ne.s32.totalorder %s55, %s56
      %p65 = scmp.eq.s32.totalorder %s24, 0
      %p66 = por %p64, %p65
      %p67 = scmp.ne.s32.totalorder %s55, %s56
      %p68 = scmp.eq.s32.totalorder %s25, 1
      %p69 = por %p67, %p68
      %p71 = scmp.ne.s32.totalorder %s56, %s70
      %p72 = scmp.eq.s32.totalorder %s25, 0
      %p73 = por %p71, %p72
      %s75 = sadd.s32 %s74, 1
      %p78 = scmp.eq.s32.totalorder %s19, 1
      %p79 = scmp.ne.s32.totalorder %s74, %s76
      %p80 = scmp.eq.s32.totalorder %s19, 0
      %p81 = por %p79, %p80
      %p82 = scmp.ne.s32.totalorder %s74, %s76
      %p83 = scmp.eq.s32.totalorder %s24, 1
      %p84 = por %p82, %p83
      %p85 = scmp.ne.s32.totalorder %s76, %s77
      %p86 = scmp.eq.s32.totalorder %s24, 0
      %p87 = por %p85, %p86
      %p88 = scmp.ne.s32.totalorder %s76, %s77
      %p89 = scmp.eq.s32.totalorder %s25, 1
      %p90 = por %p88, %p89
      %p92 = scmp.ne.s32.totalorder %s77, %s91
      %p93 = scmp.eq.s32.totalorder %s25, 0
      %p94 = por %p92, %p93
      %s96 = sadd.s32 %s95, 1
      %p99 = scmp.eq.s32.totalorder %s19, 1
      %p100 = scmp.ne.s32.totalorder %s95, %s97
      %p101 = scmp.eq.s32.totalorder %s19, 0
      %p102 = por %p100, %p101
      %p103 = scmp.ne.s32.totalorder %s95, %s97
      %p104 = scmp.eq.s32.totalorder %s24, 1
      %p105 = por %p103, %p104
      %p106 = scmp.ne.s32.totalorder %s97, %s98
      %p107 = scmp.eq.s32.totalorder %s24, 0
      %p108 = por %p106, %p107
      %p109 = scmp.ne.s32.totalorder %s97, %s98
      %p110 = scmp.eq.s32.totalorder %s25, 1
      %p111 = por %p109, %p110
      %p113 = scmp.ne.s32.totalorder %s98, %s112
      %p114 = scmp.eq.s32.totalorder %s25, 0
      %p115 = por %p113, %p114
      %s117 = sadd.s32 %s116, 1
      %p120 = scmp.eq.s32.totalorder %s19, 1
      %p121 = scmp.ne.s32.totalorder %s116, %s118
      %p122 = scmp.eq.s32.totalorder %s19, 0
      %p123 = por %p121, %p122
      %p124 = scmp.ne.s32.totalorder %s116, %s118
      %p125 = scmp.eq.s32.totalorder %s24, 1
      %p126 = por %p124, %p125
      %p127 = scmp.ne.s32.totalorder %s118, %s119
      %p128 = scmp.eq.s32.totalorder %s24, 0
      %p129 = por %p127, %p128
      %p130 = scmp.ne.s32.totalorder %s118, %s119
      %p131 = scmp.eq.s32.totalorder %s25, 1
      %p132 = por %p130, %p131
      %p134 = scmp.ne.s32.totalorder %s119, %s133
      %p135 = scmp.eq.s32.totalorder %s25, 0
      %p136 = por %p134, %p135
      %s137 = ssub.s32 %s19, %s26
      %p138 = scmp.eq.s32.totalorder %s137, 0
      %s140 = sadd.s32 %s139, 1
      %s141 = scalar_select %p138, %s139, %s140
      %p144 = pneg %p138
      %p145 = scmp.eq.s32.totalorder %s19, 1
      %p146 = por %p144, %p145
      %p147 = scmp.ne.s32.totalorder %s139, %s142
      %p148 = scmp.eq.s32.totalorder %s19, 0
      %p149 = por %p147, %p148
      %p150 = scmp.ne.s32.totalorder %s139, %s142
      %p151 = scmp.eq.s32.totalorder %s24, 1
      %p152 = por %p150, %p151
      %p153 = scmp.ne.s32.totalorder %s142, %s143
      %p154 = scmp.eq.s32.totalorder %s24, 0
      %p155 = por %p153, %p154
      %p156 = scmp.ne.s32.totalorder %s142, %s143
      %p157 = scmp.eq.s32.totalorder %s25, 1
      %p158 = por %p156, %p157
      %p160 = scmp.ne.s32.totalorder %s143, %s159
      %p161 = scmp.eq.s32.totalorder %s25, 0
      %p162 = por %p160, %p161
      %p163 = scmp.le.s32.totalorder 1, %s19
      %p164 = scmp.lt.s32.totalorder %s19, 3
      %p165 = pnand %p163, %p164
      %p166 = pneg %p165
      // Predicated region
      $region9: #{tpu_custom_call.1} parent=5 // pred_check
        _
      $region10: #{tpu_custom_call.1} parent=5 // pred_check_branch
        %168 = sbr.rel (%p165) target = $region12
      $region11: #{tpu_custom_call.1} parent=5 // pred_region
        %s169 = ssub.s32 %s19, 1
        // Predicated region
        $region13: #{tpu_custom_call.1} parent=11 // pred_check
          %p170 = pneg %p66
        $region14: #{tpu_custom_call.1} parent=11 // pred_check_branch
          %172 = sbr.rel (%p170) target = $region16
        $region15: #{tpu_custom_call.1} parent=11 // pred_region
          %s174 = ssub.s32 8192, 8192
          %175 = vsyncadd [#allocation6], %s174
          %s176 = sshll.u32 [#allocation5], 4
          %s177 = int_to_ptr.vmem [resolvable:$true] %s176
          %182 = dma.hbm_to_vmem [thread:$0]  %s1, 8192, %s177, [#allocation6], 512, 512, 32
        $region16: #{tpu_custom_call.1} parent=11 // pred_fallthru
          _
        // Predicated region
        $region17: #{tpu_custom_call.1} parent=11 // pred_check
          %p183 = pneg %p87
        $region18: #{tpu_custom_call.1} parent=11 // pred_check_branch
          %185 = sbr.rel (%p183) target = $region20
        $region19: #{tpu_custom_call.1} parent=11 // pred_region
          %s187 = ssub.s32 8192, 8192
          %188 = vsyncadd [#allocation6], %s187
          %s189 = sshll.u32 [#allocation7], 4
          %s190 = int_to_ptr.vmem [resolvable:$true] %s189
          %195 = dma.hbm_to_vmem [thread:$0]  %s2, 8192, %s190, [#allocation6], 128, 128, 8
        $region20: #{tpu_custom_call.1} parent=11 // pred_fallthru
          _
        // Predicated region
        $region21: #{tpu_custom_call.1} parent=11 // pred_check
          %p196 = pneg %p108
        $region22: #{tpu_custom_call.1} parent=11 // pred_check_branch
          %198 = sbr.rel (%p196) target = $region24
        $region23: #{tpu_custom_call.1} parent=11 // pred_region
          %s200 = ssub.s32 2048, 2048
          %201 = vsyncadd [#allocation9], %s200
          %s202 = sshll.u32 [#allocation8], 4
          %s203 = int_to_ptr.vmem [resolvable:$true] %s202
          %208 = dma.hbm_to_vmem [thread:$0]  %s3, 2048, %s203, [#allocation9], 128, 128, 8
        $region24: #{tpu_custom_call.1} parent=11 // pred_fallthru
          _
        // Predicated region
        $region25: #{tpu_custom_call.1} parent=11 // pred_check
          %p209 = pneg %p129
        $region26: #{tpu_custom_call.1} parent=11 // pred_check_branch
          %211 = sbr.rel (%p209) target = $region28
        $region27: #{tpu_custom_call.1} parent=11 // pred_region
          _
        $region28: #{tpu_custom_call.1} parent=11 // pred_fallthru
          _
      $region12: #{tpu_custom_call.1} parent=5 // pred_fallthru
        _
      %p212 = scmp.lt.s32.totalorder %s19, 2
      // Predicated region
      $region29: #{tpu_custom_call.1} parent=5 // pred_check
        %p213 = pneg %p212
      $region30: #{tpu_custom_call.1} parent=5 // pred_check_branch
        %215 = sbr.rel (%p213) target = $region32
      $region31: #{tpu_custom_call.1} parent=5 // pred_region
        // Predicated region
        $region33: #{tpu_custom_call.1} parent=31 // pred_check
          %p216 = pneg %p39
        $region34: #{tpu_custom_call.1} parent=31 // pred_check_branch
          %218 = sbr.rel (%p216) target = $region36
        $region35: #{tpu_custom_call.1} parent=31 // pred_region
          %s219 = sand.u32 %s29, 1
          %s220 = scalar_lea.sflag [#allocation3], %s219
          %s221 = sand.u32 %s29, 1
          %s222 = smul.addr %s221, 128
          %s223 = scalar_lea.vmem [#allocation2], %s222
          %s224 = smul.u32 16, %s19
          %s226 = ssub.s32 2048, 2048
          %227 = vsyncadd %s220, %s226
          %s228 = smul.addr %s224, 128
          %s229 = scalar_lea.hbm %s0, %s228
          %s230 = sshll.u32 %s223, 4
          %s231 = int_to_ptr.vmem [resolvable:$true] %s230
          %236 = dma.hbm_to_vmem [thread:$0]  %s229, 2048, %s231, %s220, 128, 128, 8
        $region36: #{tpu_custom_call.1} parent=31 // pred_fallthru
          _
      $region32: #{tpu_custom_call.1} parent=5 // pred_fallthru
        _
      %p237 = scmp.le.s32.totalorder 1, %s19
      %p238 = scmp.lt.s32.totalorder %s19, 3
      %p239 = pnand %p237, %p238
      %p240 = pneg %p239
      // Predicated region
      $region37: #{tpu_custom_call.1} parent=5 // pred_check
        _
      $region38: #{tpu_custom_call.1} parent=5 // pred_check_branch
        %242 = sbr.rel (%p239) target = $region40
      $region39: #{tpu_custom_call.1} parent=5 // pred_region
        %s243 = ssub.s32 %s19, 1
        %s244 = sand.u32 %s32, 1
        %s245 = scalar_lea.sflag [#allocation3], %s244
        %s246 = sand.u32 %s32, 1
        %s247 = smul.addr %s246, 128
        %s248 = scalar_lea.vmem [#allocation2], %s247
        // Predicated region
        $region41: #{tpu_custom_call.1} parent=39 // pred_check
          %p249 = pneg %p45
        $region42: #{tpu_custom_call.1} parent=39 // pred_check_branch
          %251 = sbr.rel (%p249) target = $region44
        $region43: #{tpu_custom_call.1} parent=39 // pred_region
          %252 = dma.done %s245, 2048
        $region44: #{tpu_custom_call.1} parent=39 // pred_fallthru
          _
        // Predicated region
        $region45: #{tpu_custom_call.1} parent=39 // pred_check
          %p253 = pneg %p66
        $region46: #{tpu_custom_call.1} parent=39 // pred_check_branch
          %255 = sbr.rel (%p253) target = $region48
        $region47: #{tpu_custom_call.1} parent=39 // pred_region
          %256 = dma.done [#allocation6], 8192
        $region48: #{tpu_custom_call.1} parent=39 // pred_fallthru
          _
        // Predicated region
        $region49: #{tpu_custom_call.1} parent=39 // pred_check
          %p257 = pneg %p87
        $region50: #{tpu_custom_call.1} parent=39 // pred_check_branch
          %259 = sbr.rel (%p257) target = $region52
        $region51: #{tpu_custom_call.1} parent=39 // pred_region
          %260 = dma.done [#allocation6], 8192
        $region52: #{tpu_custom_call.1} parent=39 // pred_fallthru
          _
        // Predicated region
        $region53: #{tpu_custom_call.1} parent=39 // pred_check
          %p261 = pneg %p108
        $region54: #{tpu_custom_call.1} parent=39 // pred_check_branch
          %263 = sbr.rel (%p261) target = $region56
        $region55: #{tpu_custom_call.1} parent=39 // pred_region
          %264 = dma.done [#allocation9], 2048
        $region56: #{tpu_custom_call.1} parent=39 // pred_fallthru
          _
        %s265 = sand.u32 %s32, 1
        %s266 = scalar_lea.sflag [#allocation3], %s265
        %s267 = sand.u32 %s32, 1
        %s268 = smul.addr %s267, 128
        %s269 = scalar_lea.vmem [#allocation2], %s268
        %p270 = pneg %p45
        %p271 = pneg %p42
        %p272 = pneg %p66
        %p273 = pneg %p63
        %p274 = pneg %p87
        %p275 = pneg %p84
        %p276 = pneg %p108
        %p277 = pneg %p105
        %p278 = pneg %p129
        %p279 = pneg %p126
        %p280 = pneg %p155
        %p281 = pneg %p152
        %s282 = sand.u32 %s142, 1
        %s283 = scalar_lea.sflag [#allocation4], %s282
        %s284 = sand.u32 %s142, 1
        %s285 = smul.addr %s284, 128
        %s286 = scalar_lea.vmem [#allocation10], %s285
        %s287 = smul.u32 16, %s24
        %s288 = smul.u32 16, %s24
        %v289 = vld [vmem:[%s248] sm:$0xff]
        %v290 = vld [vmem:[%s248 + $0x8] sm:$0xff]
        %v291 = vld [vmem:[%s248 + $0x10] sm:$0xff]
        %v292 = vld [vmem:[%s248 + $0x18] sm:$0xff]
        %v293 = vld [vmem:[%s248 + $0x20] sm:$0xff]
        %v294 = vld [vmem:[%s248 + $0x28] sm:$0xff]
        %v295 = vld [vmem:[%s248 + $0x30] sm:$0xff]
        %v296 = vld [vmem:[%s248 + $0x38] sm:$0xff]
        %v297 = vld [vmem:[%s248 + $0x40] sm:$0xff]
        %v298 = vld [vmem:[%s248 + $0x48] sm:$0xff]
        %v299 = vld [vmem:[%s248 + $0x50] sm:$0xff]
        %v300 = vld [vmem:[%s248 + $0x58] sm:$0xff]
        %v301 = vld [vmem:[%s248 + $0x60] sm:$0xff]
        %v302 = vld [vmem:[%s248 + $0x68] sm:$0xff]
        %v303 = vld [vmem:[%s248 + $0x70] sm:$0xff]
        %v304 = vld [vmem:[%s248 + $0x78] sm:$0xff]
        %v305 = vrcp.pop 10.0
        %v306 = vmul.f32 %v289, %v305
        %v307 = vmul.f32 %v290, %v305
        %v308 = vmul.f32 %v291, %v305
        %v309 = vmul.f32 %v292, %v305
        %v310 = vmul.f32 %v293, %v305
        %v311 = vmul.f32 %v294, %v305
        %v312 = vmul.f32 %v295, %v305
        %v313 = vmul.f32 %v296, %v305
        %v314 = vmul.f32 %v297, %v305
        %v315 = vmul.f32 %v298, %v305
        %v316 = vmul.f32 %v299, %v305
        %v317 = vmul.f32 %v300, %v305
        %v318 = vmul.f32 %v301, %v305
        %v319 = vmul.f32 %v302, %v305
        %v320 = vmul.f32 %v303, %v305
        %v321 = vmul.f32 %v304, %v305
        %v322 = vfloor.f32 %v306
        %v323 = vfloor.f32 %v307
        %v324 = vfloor.f32 %v308
        %v325 = vfloor.f32 %v309
        %v326 = vfloor.f32 %v310
        %v327 = vfloor.f32 %v311
        %v328 = vfloor.f32 %v312
        %v329 = vfloor.f32 %v313
        %v330 = vfloor.f32 %v314
        %v331 = vfloor.f32 %v315
        %v332 = vfloor.f32 %v316
        %v333 = vfloor.f32 %v317
        %v334 = vfloor.f32 %v318
        %v335 = vfloor.f32 %v319
        %v336 = vfloor.f32 %v320
        %v337 = vfloor.f32 %v321
        %v338 = vsub.f32 %v322, 1.0
        %v339 = vsub.f32 %v323, 1.0
        %v340 = vsub.f32 %v324, 1.0
        %v341 = vsub.f32 %v325, 1.0
        %v342 = vsub.f32 %v326, 1.0
        %v343 = vsub.f32 %v327, 1.0
        %v344 = vsub.f32 %v328, 1.0
        %v345 = vsub.f32 %v329, 1.0
        %v346 = vsub.f32 %v330, 1.0
        %v347 = vsub.f32 %v331, 1.0
        %v348 = vsub.f32 %v332, 1.0
        %v349 = vsub.f32 %v333, 1.0
        %v350 = vsub.f32 %v334, 1.0
        %v351 = vsub.f32 %v335, 1.0
        %v352 = vsub.f32 %v336, 1.0
        %v353 = vsub.f32 %v337, 1.0
        %v354 = vld [vmem:[#allocation5] sm:$0xff]
        %v355 = vld [vmem:[#allocation5 + $0x8] sm:$0xff]
        %v356 = vld [vmem:[#allocation5 + $0x10] sm:$0xff]
        %v357 = vld [vmem:[#allocation5 + $0x18] sm:$0xff]
        %v358 = vld [vmem:[#allocation5 + $0x20] sm:$0xff]
        %v359 = vld [vmem:[#allocation5 + $0x28] sm:$0xff]
        %v360 = vld [vmem:[#allocation5 + $0x30] sm:$0xff]
        %v361 = vld [vmem:[#allocation5 + $0x38] sm:$0xff]
        %v362 = vld [vmem:[#allocation5 + $0x40] sm:$0xff]
        %v363 = vld [vmem:[#allocation5 + $0x48] sm:$0xff]
        %v364 = vld [vmem:[#allocation5 + $0x50] sm:$0xff]
        %v365 = vld [vmem:[#allocation5 + $0x58] sm:$0xff]
        %v366 = vld [vmem:[#allocation5 + $0x60] sm:$0xff]
        %v367 = vld [vmem:[#allocation5 + $0x68] sm:$0xff]
        %v368 = vld [vmem:[#allocation5 + $0x70] sm:$0xff]
        %v369 = vld [vmem:[#allocation5 + $0x78] sm:$0xff]
        %v370 = vld [vmem:[#allocation5 + $0x80] sm:$0xff]
        %v371 = vld [vmem:[#allocation5 + $0x88] sm:$0xff]
        %v372 = vld [vmem:[#allocation5 + $0x90] sm:$0xff]
        %v373 = vld [vmem:[#allocation5 + $0x98] sm:$0xff]
        %v374 = vld [vmem:[#allocation5 + $0xa0] sm:$0xff]
        %v375 = vld [vmem:[#allocation5 + $0xa8] sm:$0xff]
        %v376 = vld [vmem:[#allocation5 + $0xb0] sm:$0xff]
        %v377 = vld [vmem:[#allocation5 + $0xb8] sm:$0xff]
        %v378 = vld [vmem:[#allocation5 + $0xc0] sm:$0xff]
        %v379 = vld [vmem:[#allocation5 + $0xc8] sm:$0xff]
        %v380 = vld [vmem:[#allocation5 + $0xd0] sm:$0xff]
        %v381 = vld [vmem:[#allocation5 + $0xd8] sm:$0xff]
        %v382 = vld [vmem:[#allocation5 + $0xe0] sm:$0xff]
        %v383 = vld [vmem:[#allocation5 + $0xe8] sm:$0xff]
        %v384 = vld [vmem:[#allocation5 + $0xf0] sm:$0xff]
        %v385 = vld [vmem:[#allocation5 + $0xf8] sm:$0xff]
        %v386 = vld [vmem:[#allocation5 + $0x100] sm:$0xff]
        %v387 = vld [vmem:[#allocation5 + $0x108] sm:$0xff]
        %v388 = vld [vmem:[#allocation5 + $0x110] sm:$0xff]
        %v389 = vld [vmem:[#allocation5 + $0x118] sm:$0xff]
        %v390 = vld [vmem:[#allocation5 + $0x120] sm:$0xff]
        %v391 = vld [vmem:[#allocation5 + $0x128] sm:$0xff]
        %v392 = vld [vmem:[#allocation5 + $0x130] sm:$0xff]
        %v393 = vld [vmem:[#allocation5 + $0x138] sm:$0xff]
        %v394 = vld [vmem:[#allocation5 + $0x140] sm:$0xff]
        %v395 = vld [vmem:[#allocation5 + $0x148] sm:$0xff]
        %v396 = vld [vmem:[#allocation5 + $0x150] sm:$0xff]
        %v397 = vld [vmem:[#allocation5 + $0x158] sm:$0xff]
        %v398 = vld [vmem:[#allocation5 + $0x160] sm:$0xff]
        %v399 = vld [vmem:[#allocation5 + $0x168] sm:$0xff]
        %v400 = vld [vmem:[#allocation5 + $0x170] sm:$0xff]
        %v401 = vld [vmem:[#allocation5 + $0x178] sm:$0xff]
        %v402 = vld [vmem:[#allocation5 + $0x180] sm:$0xff]
        %v403 = vld [vmem:[#allocation5 + $0x188] sm:$0xff]
        %v404 = vld [vmem:[#allocation5 + $0x190] sm:$0xff]
        %v405 = vld [vmem:[#allocation5 + $0x198] sm:$0xff]
        %v406 = vld [vmem:[#allocation5 + $0x1a0] sm:$0xff]
        %v407 = vld [vmem:[#allocation5 + $0x1a8] sm:$0xff]
        %v408 = vld [vmem:[#allocation5 + $0x1b0] sm:$0xff]
        %v409 = vld [vmem:[#allocation5 + $0x1b8] sm:$0xff]
        %v410 = vld [vmem:[#allocation5 + $0x1c0] sm:$0xff]
        %v411 = vld [vmem:[#allocation5 + $0x1c8] sm:$0xff]
        %v412 = vld [vmem:[#allocation5 + $0x1d0] sm:$0xff]
        %v413 = vld [vmem:[#allocation5 + $0x1d8] sm:$0xff]
        %v414 = vld [vmem:[#allocation5 + $0x1e0] sm:$0xff]
        %v415 = vld [vmem:[#allocation5 + $0x1e8] sm:$0xff]
        %v416 = vld [vmem:[#allocation5 + $0x1f0] sm:$0xff]
        %v417 = vld [vmem:[#allocation5 + $0x1f8] sm:$0xff]
        %418 = vmatprep.subr.mxu0 %v355
        %419 = vmatpush1.msra.mxu0 %v354
        %420 = vmatprep.subr.mxu0 %v359
        %421 = vmatpush1.msra.mxu0 %v358
        %422 = vmatprep.subr.mxu0 %v363
        %423 = vmatpush1.msra.mxu0 %v362
        %424 = vmatprep.subr.mxu0 %v367
        %425 = vmatpush1.msra.mxu0 %v366
        %426 = vmatprep.subr.mxu0 %v371
        %427 = vmatpush1.msra.mxu0 %v370
        %428 = vmatprep.subr.mxu0 %v375
        %429 = vmatpush1.msra.mxu0 %v374
        %430 = vmatprep.subr.mxu0 %v379
        %431 = vmatpush1.msra.mxu0 %v378
        %432 = vmatprep.subr.mxu0 %v383
        %433 = vmatpush1.msra.mxu0 %v382
        %434 = vmatprep.subr.mxu0 %v387
        %435 = vmatpush1.msra.mxu0 %v386
        %436 = vmatprep.subr.mxu0 %v391
        %437 = vmatpush1.msra.mxu0 %v390
        %438 = vmatprep.subr.mxu0 %v395
        %439 = vmatpush1.msra.mxu0 %v394
        %440 = vmatprep.subr.mxu0 %v399
        %441 = vmatpush1.msra.mxu0 %v398
        %442 = vmatprep.subr.mxu0 %v403
        %443 = vmatpush1.msra.mxu0 %v402
        %444 = vmatprep.subr.mxu0 %v407
        %445 = vmatpush1.msra.mxu0 %v406
        %446 = vmatprep.subr.mxu0 %v411
        %447 = vmatpush1.msra.mxu0 %v410
        %448 = vmatprep.subr.mxu0 %v415
        %449 = vmatpush1.msra.mxu0 %v414
        %450 = vmatprep.subr.mxu0 0.0
        %451 = vmatpush1.msra.mxu0 0.0
        %452 = vmatprep.subr.mxu0 0.0
        %453 = vmatpush1.msra.mxu0 0.0
        %454 = vmatprep.subr.mxu0 0.0
        %455 = vmatpush1.msra.mxu0 0.0
        %456 = vmatprep.subr.mxu0 0.0
        %457 = vmatpush1.msra.mxu0 0.0
        %458 = vmatprep.subr.mxu0 0.0
        %459 = vmatpush1.msra.mxu0 0.0
        %460 = vmatprep.subr.mxu0 0.0
        %461 = vmatpush1.msra.mxu0 0.0
        %462 = vmatprep.subr.mxu0 0.0
        %463 = vmatpush1.msra.mxu0 0.0
        %464 = vmatprep.subr.mxu0 0.0
        %465 = vmatpush1.msra.mxu0 0.0
        %466 = vmatprep.subr.mxu0 0.0
        %467 = vmatpush1.msra.mxu0 0.0
        %468 = vmatprep.subr.mxu0 0.0
        %469 = vmatpush1.msra.mxu0 0.0
        %470 = vmatprep.subr.mxu0 0.0
        %471 = vmatpush1.msra.mxu0 0.0
        %472 = vmatprep.subr.mxu0 0.0
        %473 = vmatpush1.msra.mxu0 0.0
        %474 = vmatprep.subr.mxu0 0.0
        %475 = vmatpush1.msra.mxu0 0.0
        %476 = vmatprep.subr.mxu0 0.0
        %477 = vmatpush1.msra.mxu0 0.0
        %478 = vmatprep.subr.mxu0 0.0
        %479 = vmatpush1.msra.mxu0 0.0
        %480 = vmatprep.subr.mxu0 0.0
        %481 = vmatpush1.msra.mxu0 0.0
        %482 = vmatprep.mubr.f32.mxu0 0.0
        %483 = vmatmul.mubr.f32.gmra.mrb[0].mxu0 %v338
        %v484 = vpop.f32.mrb[0].mxu0
        %v485 = vadd.f32 3.0, %v484
        %v486 = vpop.f32.mrb[0].mxu0
        %v487 = vadd.f32 3.0, %v486
        %488 = vmatprep.mubr.f32.mxu0 0.0
        %489 = vmatmul.mubr.f32.gmra.mrb[0].mxu0 %v339
        %v490 = vpop.f32.mrb[0].mxu0
        %v491 = vadd.f32 3.0, %v490
        %v492 = vpop.f32.mrb[0].mxu0
        %v493 = vadd.f32 3.0, %v492
        %494 = vmatprep.mubr.f32.mxu0 0.0
        %495 = vmatmul.mubr.f32.gmra.mrb[0].mxu0 %v340
        %v496 = vpop.f32.mrb[0].mxu0
        %v497 = vadd.f32 3.0, %v496
        %v498 = vpop.f32.mrb[0].mxu0
        %v499 = vadd.f32 3.0, %v498
        %500 = vmatprep.mubr.f32.mxu0 0.0
        %501 = vmatmul.mubr.f32.gmra.mrb[0].mxu0 %v341
        %v502 = vpop.f32.mrb[0].mxu0
        %v503 = vadd.f32 3.0, %v502
        %v504 = vpop.f32.mrb[0].mxu0
        %v505 = vadd.f32 3.0, %v504
        %506 = vmatprep.mubr.f32.mxu0 0.0
        %507 = vmatmul.mubr.f32.gmra.mrb[0].mxu0 %v342
        %v508 = vpop.f32.mrb[0].mxu0
        %v509 = vadd.f32 3.0, %v508
        %v510 = vpop.f32.mrb[0].mxu0
        %v511 = vadd.f32 3.0, %v510
        %512 = vmatprep.mubr.f32.mxu0 0.0
        %513 = vmatmul.mubr.f32.gmra.mrb[0].mxu0 %v343
        %v514 = vpop.f32.mrb[0].mxu0
        %v515 = vadd.f32 3.0, %v514
        %v516 = vpop.f32.mrb[0].mxu0
        %v517 = vadd.f32 3.0, %v516
        %518 = vmatprep.mubr.f32.mxu0 0.0
        %519 = vmatmul.mubr.f32.gmra.mrb[0].mxu0 %v344
        %v520 = vpop.f32.mrb[0].mxu0
        %v521 = vadd.f32 3.0, %v520
        %v522 = vpop.f32.mrb[0].mxu0
        %v523 = vadd.f32 3.0, %v522
        %524 = vmatprep.mubr.f32.mxu0 0.0
        %525 = vmatmul.mubr.f32.gmra.mrb[0].mxu0 %v345
        %v526 = vpop.f32.mrb[0].mxu0
        %v527 = vadd.f32 3.0, %v526
        %v528 = vpop.f32.mrb[0].mxu0
        %v529 = vadd.f32 3.0, %v528
        %530 = vmatprep.mubr.f32.mxu0 0.0
        %531 = vmatmul.mubr.f32.gmra.mrb[0].mxu0 %v346
        %v532 = vpop.f32.mrb[0].mxu0
        %v533 = vadd.f32 3.0, %v532
        %v534 = vpop.f32.mrb[0].mxu0
        %v535 = vadd.f32 3.0, %v534
        %536 = vmatprep.mubr.f32.mxu0 0.0
        %537 = vmatmul.mubr.f32.gmra.mrb[0].mxu0 %v347
        %v538 = vpop.f32.mrb[0].mxu0
        %v539 = vadd.f32 3.0, %v538
        %v540 = vpop.f32.mrb[0].mxu0
        %v541 = vadd.f32 3.0, %v540
        %542 = vmatprep.mubr.f32.mxu0 0.0
        %543 = vmatmul.mubr.f32.gmra.mrb[0].mxu0 %v348
        %v544 = vpop.f32.mrb[0].mxu0
        %v545 = vadd.f32 3.0, %v544
        %v546 = vpop.f32.mrb[0].mxu0
        %v547 = vadd.f32 3.0, %v546
        %548 = vmatprep.mubr.f32.mxu0 0.0
        %549 = vmatmul.mubr.f32.gmra.mrb[0].mxu0 %v349
        %v550 = vpop.f32.mrb[0].mxu0
        %v551 = vadd.f32 3.0, %v550
        %v552 = vpop.f32.mrb[0].mxu0
        %v553 = vadd.f32 3.0, %v552
        %554 = vmatprep.mubr.f32.mxu0 0.0
        %555 = vmatmul.mubr.f32.gmra.mrb[0].mxu0 %v350
        %v556 = vpop.f32.mrb[0].mxu0
        %v557 = vadd.f32 3.0, %v556
        %v558 = vpop.f32.mrb[0].mxu0
        %v559 = vadd.f32 3.0, %v558
        %560 = vmatprep.mubr.f32.mxu0 0.0
        %561 = vmatmul.mubr.f32.gmra.mrb[0].mxu0 %v351
        %v562 = vpop.f32.mrb[0].mxu0
        %v563 = vadd.f32 3.0, %v562
        %v564 = vpop.f32.mrb[0].mxu0
        %v565 = vadd.f32 3.0, %v564
        %566 = vmatprep.mubr.f32.mxu0 0.0
        %567 = vmatmul.mubr.f32.gmra.mrb[0].mxu0 %v352
        %v568 = vpop.f32.mrb[0].mxu0
        %v569 = vadd.f32 3.0, %v568
        %v570 = vpop.f32.mrb[0].mxu0
        %v571 = vadd.f32 3.0, %v570
        %572 = vmatprep.mubr.f32.mxu0 0.0
        %573 = vmatmul.mubr.f32.gmra.mrb[0].mxu0 %v353
        %v574 = vpop.f32.mrb[0].mxu0
        %v575 = vadd.f32 3.0, %v574
        %v576 = vpop.f32.mrb[0].mxu0
        %v577 = vadd.f32 3.0, %v576
        %578 = vdwg.mxu0
        %579 = vmatprep.subr.mxu0 %v357
        %580 = vmatpush1.msra.mxu0 %v356
        %581 = vmatprep.subr.mxu0 %v361
        %582 = vmatpush1.msra.mxu0 %v360
        %583 = vmatprep.subr.mxu0 %v365
        %584 = vmatpush1.msra.mxu0 %v364
        %585 = vmatprep.subr.mxu0 %v369
        %586 = vmatpush1.msra.mxu0 %v368
        %587 = vmatprep.subr.mxu0 %v373
        %588 = vmatpush1.msra.mxu0 %v372
        %589 = vmatprep.subr.mxu0 %v377
        %590 = vmatpush1.msra.mxu0 %v376
        %591 = vmatprep.subr.mxu0 %v381
        %592 = vmatpush1.msra.mxu0 %v380
        %593 = vmatprep.subr.mxu0 %v385
        %594 = vmatpush1.msra.mxu0 %v384
        %595 = vmatprep.subr.mxu0 %v389
        %596 = vmatpush1.msra.mxu0 %v388
        %597 = vmatprep.subr.mxu0 %v393
        %598 = vmatpush1.msra.mxu0 %v392
        %599 = vmatprep.subr.mxu0 %v397
        %600 = vmatpush1.msra.mxu0 %v396
        %601 = vmatprep.subr.mxu0 %v401
        %602 = vmatpush1.msra.mxu0 %v400
        %603 = vmatprep.subr.mxu0 %v405
        %604 = vmatpush1.msra.mxu0 %v404
        %605 = vmatprep.subr.mxu0 %v409
        %606 = vmatpush1.msra.mxu0 %v408
        %607 = vmatprep.subr.mxu0 %v413
        %608 = vmatpush1.msra.mxu0 %v412
        %609 = vmatprep.subr.mxu0 %v417
        %610 = vmatpush1.msra.mxu0 %v416
        %611 = vmatprep.subr.mxu0 0.0
        %612 = vmatpush1.msra.mxu0 0.0
        %613 = vmatprep.subr.mxu0 0.0
        %614 = vmatpush1.msra.mxu0 0.0
        %615 = vmatprep.subr.mxu0 0.0
        %616 = vmatpush1.msra.mxu0 0.0
        %617 = vmatprep.subr.mxu0 0.0
        %618 = vmatpush1.msra.mxu0 0.0
        %619 = vmatprep.subr.mxu0 0.0
        %620 = vmatpush1.msra.mxu0 0.0
        %621 = vmatprep.subr.mxu0 0.0
        %622 = vmatpush1.msra.mxu0 0.0
        %623 = vmatprep.subr.mxu0 0.0
        %624 = vmatpush1.msra.mxu0 0.0
        %625 = vmatprep.subr.mxu0 0.0
        %626 = vmatpush1.msra.mxu0 0.0
        %627 = vmatprep.subr.mxu0 0.0
        %628 = vmatpush1.msra.mxu0 0.0
        %629 = vmatprep.subr.mxu0 0.0
        %630 = vmatpush1.msra.mxu0 0.0
        %631 = vmatprep.subr.mxu0 0.0
        %632 = vmatpush1.msra.mxu0 0.0
        %633 = vmatprep.subr.mxu0 0.0
        %634 = vmatpush1.msra.mxu0 0.0
        %635 = vmatprep.subr.mxu0 0.0
        %636 = vmatpush1.msra.mxu0 0.0
        %637 = vmatprep.subr.mxu0 0.0
        %638 = vmatpush1.msra.mxu0 0.0
        %639 = vmatprep.subr.mxu0 0.0
        %640 = vmatpush1.msra.mxu0 0.0
        %641 = vmatprep.subr.mxu0 0.0
        %642 = vmatpush1.msra.mxu0 0.0
        %643 = vmatprep.mubr.f32.mxu0 0.0
        %644 = vmatmul.mubr.f32.gmra.mrb[0].mxu0 %v338
        %v645 = vpop.f32.mrb[0].mxu0
        %v646 = vadd.f32 3.0, %v645
        %v647 = vpop.f32.mrb[0].mxu0
        %v648 = vadd.f32 3.0, %v647
        %649 = vmatprep.mubr.f32.mxu0 0.0
        %650 = vmatmul.mubr.f32.gmra.mrb[0].mxu0 %v339
        %v651 = vpop.f32.mrb[0].mxu0
        %v652 = vadd.f32 3.0, %v651
        %v653 = vpop.f32.mrb[0].mxu0
        %v654 = vadd.f32 3.0, %v653
        %655 = vmatprep.mubr.f32.mxu0 0.0
        %656 = vmatmul.mubr.f32.gmra.mrb[0].mxu0 %v340
        %v657 = vpop.f32.mrb[0].mxu0
        %v658 = vadd.f32 3.0, %v657
        %v659 = vpop.f32.mrb[0].mxu0
        %v660 = vadd.f32 3.0, %v659
        %661 = vmatprep.mubr.f32.mxu0 0.0
        %662 = vmatmul.mubr.f32.gmra.mrb[0].mxu0 %v341
        %v663 = vpop.f32.mrb[0].mxu0
        %v664 = vadd.f32 3.0, %v663
        %v665 = vpop.f32.mrb[0].mxu0
        %v666 = vadd.f32 3.0, %v665
        %667 = vmatprep.mubr.f32.mxu0 0.0
        %668 = vmatmul.mubr.f32.gmra.mrb[0].mxu0 %v342
        %v669 = vpop.f32.mrb[0].mxu0
        %v670 = vadd.f32 3.0, %v669
        %v671 = vpop.f32.mrb[0].mxu0
        %v672 = vadd.f32 3.0, %v671
        %673 = vmatprep.mubr.f32.mxu0 0.0
        %674 = vmatmul.mubr.f32.gmra.mrb[0].mxu0 %v343
        %v675 = vpop.f32.mrb[0].mxu0
        %v676 = vadd.f32 3.0, %v675
        %v677 = vpop.f32.mrb[0].mxu0
        %v678 = vadd.f32 3.0, %v677
        %679 = vmatprep.mubr.f32.mxu0 0.0
        %680 = vmatmul.mubr.f32.gmra.mrb[0].mxu0 %v344
        %v681 = vpop.f32.mrb[0].mxu0
        %v682 = vadd.f32 3.0, %v681
        %v683 = vpop.f32.mrb[0].mxu0
        %v684 = vadd.f32 3.0, %v683
        %685 = vmatprep.mubr.f32.mxu0 0.0
        %686 = vmatmul.mubr.f32.gmra.mrb[0].mxu0 %v345
        %v687 = vpop.f32.mrb[0].mxu0
        %v688 = vadd.f32 3.0, %v687
        %v689 = vpop.f32.mrb[0].mxu0
        %v690 = vadd.f32 3.0, %v689
        %691 = vmatprep.mubr.f32.mxu0 0.0
        %692 = vmatmul.mubr.f32.gmra.mrb[0].mxu0 %v346
        %v693 = vpop.f32.mrb[0].mxu0
        %v694 = vadd.f32 3.0, %v693
        %v695 = vpop.f32.mrb[0].mxu0
        %v696 = vadd.f32 3.0, %v695
        %697 = vmatprep.mubr.f32.mxu0 0.0
        %698 = vmatmul.mubr.f32.gmra.mrb[0].mxu0 %v347
        %v699 = vpop.f32.mrb[0].mxu0
        %v700 = vadd.f32 3.0, %v699
        %v701 = vpop.f32.mrb[0].mxu0
        %v702 = vadd.f32 3.0, %v701
        %703 = vmatprep.mubr.f32.mxu0 0.0
        %704 = vmatmul.mubr.f32.gmra.mrb[0].mxu0 %v348
        %v705 = vpop.f32.mrb[0].mxu0
        %v706 = vadd.f32 3.0, %v705
        %v707 = vpop.f32.mrb[0].mxu0
        %v708 = vadd.f32 3.0, %v707
        %709 = vmatprep.mubr.f32.mxu0 0.0
        %710 = vmatmul.mubr.f32.gmra.mrb[0].mxu0 %v349
        %v711 = vpop.f32.mrb[0].mxu0
        %v712 = vadd.f32 3.0, %v711
        %v713 = vpop.f32.mrb[0].mxu0
        %v714 = vadd.f32 3.0, %v713
        %715 = vmatprep.mubr.f32.mxu0 0.0
        %716 = vmatmul.mubr.f32.gmra.mrb[0].mxu0 %v350
        %v717 = vpop.f32.mrb[0].mxu0
        %v718 = vadd.f32 3.0, %v717
        %v719 = vpop.f32.mrb[0].mxu0
        %v720 = vadd.f32 3.0, %v719
        %721 = vmatprep.mubr.f32.mxu0 0.0
        %722 = vmatmul.mubr.f32.gmra.mrb[0].mxu0 %v351
        %v723 = vpop.f32.mrb[0].mxu0
        %v724 = vadd.f32 3.0, %v723
        %v725 = vpop.f32.mrb[0].mxu0
        %v726 = vadd.f32 3.0, %v725
        %727 = vmatprep.mubr.f32.mxu0 0.0
        %728 = vmatmul.mubr.f32.gmra.mrb[0].mxu0 %v352
        %v729 = vpop.f32.mrb[0].mxu0
        %v730 = vadd.f32 3.0, %v729
        %v731 = vpop.f32.mrb[0].mxu0
        %v732 = vadd.f32 3.0, %v731
        %733 = vmatprep.mubr.f32.mxu0 0.0
        %734 = vmatmul.mubr.f32.gmra.mrb[0].mxu0 %v353
        %v735 = vpop.f32.mrb[0].mxu0
        %v736 = vadd.f32 3.0, %v735
        %v737 = vpop.f32.mrb[0].mxu0
        %v738 = vadd.f32 3.0, %v737
        %739 = vdwg.mxu0
        %v740 = vmax.f32 %v485, 0.0
        %v741 = vmax.f32 %v487, 0.0
        %v742 = vmax.f32 %v646, 0.0
        %v743 = vmax.f32 %v648, 0.0
        %v744 = vmax.f32 %v491, 0.0
        %v745 = vmax.f32 %v493, 0.0
        %v746 = vmax.f32 %v652, 0.0
        %v747 = vmax.f32 %v654, 0.0
        %v748 = vmax.f32 %v497, 0.0
        %v749 = vmax.f32 %v499, 0.0
        %v750 = vmax.f32 %v658, 0.0
        %v751 = vmax.f32 %v660, 0.0
        %v752 = vmax.f32 %v503, 0.0
        %v753 = vmax.f32 %v505, 0.0
        %v754 = vmax.f32 %v664, 0.0
        %v755 = vmax.f32 %v666, 0.0
        %v756 = vmax.f32 %v509, 0.0
        %v757 = vmax.f32 %v511, 0.0
        %v758 = vmax.f32 %v670, 0.0
        %v759 = vmax.f32 %v672, 0.0
        %v760 = vmax.f32 %v515, 0.0
        %v761 = vmax.f32 %v517, 0.0
        %v762 = vmax.f32 %v676, 0.0
        %v763 = vmax.f32 %v678, 0.0
        %v764 = vmax.f32 %v521, 0.0
        %v765 = vmax.f32 %v523, 0.0
        %v766 = vmax.f32 %v682, 0.0
        %v767 = vmax.f32 %v684, 0.0
        %v768 = vmax.f32 %v527, 0.0
        %v769 = vmax.f32 %v529, 0.0
        %v770 = vmax.f32 %v688, 0.0
        %v771 = vmax.f32 %v690, 0.0
        %v772 = vmax.f32 %v533, 0.0
        %v773 = vmax.f32 %v535, 0.0
        %v774 = vmax.f32 %v694, 0.0
        %v775 = vmax.f32 %v696, 0.0
        %v776 = vmax.f32 %v539, 0.0
        %v777 = vmax.f32 %v541, 0.0
        %v778 = vmax.f32 %v700, 0.0
        %v779 = vmax.f32 %v702, 0.0
        %v780 = vmax.f32 %v545, 0.0
        %v781 = vmax.f32 %v547, 0.0
        %v782 = vmax.f32 %v706, 0.0
        %v783 = vmax.f32 %v708, 0.0
        %v784 = vmax.f32 %v551, 0.0
        %v785 = vmax.f32 %v553, 0.0
        %v786 = vmax.f32 %v712, 0.0
        %v787 = vmax.f32 %v714, 0.0
        %v788 = vmax.f32 %v557, 0.0
        %v789 = vmax.f32 %v559, 0.0
        %v790 = vmax.f32 %v718, 0.0
        %v791 = vmax.f32 %v720, 0.0
        %v792 = vmax.f32 %v563, 0.0
        %v793 = vmax.f32 %v565, 0.0
        %v794 = vmax.f32 %v724, 0.0
        %v795 = vmax.f32 %v726, 0.0
        %v796 = vmax.f32 %v569, 0.0
        %v797 = vmax.f32 %v571, 0.0
        %v798 = vmax.f32 %v730, 0.0
        %v799 = vmax.f32 %v732, 0.0
        %v800 = vmax.f32 %v575, 0.0
        %v801 = vmax.f32 %v577, 0.0
        %v802 = vmax.f32 %v736, 0.0
        %v803 = vmax.f32 %v738, 0.0
        %v804 = vrcp.pop 400.0
        %v805 = vmul.f32 %v740, %v804
        %v806 = vmul.f32 %v741, %v804
        %v807 = vmul.f32 %v742, %v804
        %v808 = vmul.f32 %v743, %v804
        %v809 = vmul.f32 %v744, %v804
        %v810 = vmul.f32 %v745, %v804
        %v811 = vmul.f32 %v746, %v804
        %v812 = vmul.f32 %v747, %v804
        %v813 = vmul.f32 %v748, %v804
        %v814 = vmul.f32 %v749, %v804
        %v815 = vmul.f32 %v750, %v804
        %v816 = vmul.f32 %v751, %v804
        %v817 = vmul.f32 %v752, %v804
        %v818 = vmul.f32 %v753, %v804
        %v819 = vmul.f32 %v754, %v804
        %v820 = vmul.f32 %v755, %v804
        %v821 = vmul.f32 %v756, %v804
        %v822 = vmul.f32 %v757, %v804
        %v823 = vmul.f32 %v758, %v804
        %v824 = vmul.f32 %v759, %v804
        %v825 = vmul.f32 %v760, %v804
        %v826 = vmul.f32 %v761, %v804
        %v827 = vmul.f32 %v762, %v804
        %v828 = vmul.f32 %v763, %v804
        %v829 = vmul.f32 %v764, %v804
        %v830 = vmul.f32 %v765, %v804
        %v831 = vmul.f32 %v766, %v804
        %v832 = vmul.f32 %v767, %v804
        %v833 = vmul.f32 %v768, %v804
        %v834 = vmul.f32 %v769, %v804
        %v835 = vmul.f32 %v770, %v804
        %v836 = vmul.f32 %v771, %v804
        %v837 = vmul.f32 %v772, %v804
        %v838 = vmul.f32 %v773, %v804
        %v839 = vmul.f32 %v774, %v804
        %v840 = vmul.f32 %v775, %v804
        %v841 = vmul.f32 %v776, %v804
        %v842 = vmul.f32 %v777, %v804
        %v843 = vmul.f32 %v778, %v804
        %v844 = vmul.f32 %v779, %v804
        %v845 = vmul.f32 %v780, %v804
        %v846 = vmul.f32 %v781, %v804
        %v847 = vmul.f32 %v782, %v804
        %v848 = vmul.f32 %v783, %v804
        %v849 = vmul.f32 %v784, %v804
        %v850 = vmul.f32 %v785, %v804
        %v851 = vmul.f32 %v786, %v804
        %v852 = vmul.f32 %v787, %v804
        %v853 = vmul.f32 %v788, %v804
        %v854 = vmul.f32 %v789, %v804
        %v855 = vmul.f32 %v790, %v804
        %v856 = vmul.f32 %v791, %v804
        %v857 = vmul.f32 %v792, %v804
        %v858 = vmul.f32 %v793, %v804
        %v859 = vmul.f32 %v794, %v804
        %v860 = vmul.f32 %v795, %v804
        %v861 = vmul.f32 %v796, %v804
        %v862 = vmul.f32 %v797, %v804
        %v863 = vmul.f32 %v798, %v804
        %v864 = vmul.f32 %v799, %v804
        %v865 = vmul.f32 %v800, %v804
        %v866 = vmul.f32 %v801, %v804
        %v867 = vmul.f32 %v802, %v804
        %v868 = vmul.f32 %v803, %v804
        %v869 = vfloor.f32 %v805
        %v870 = vfloor.f32 %v806
        %v871 = vfloor.f32 %v807
        %v872 = vfloor.f32 %v808
        %v873 = vfloor.f32 %v809
        %v874 = vfloor.f32 %v810
        %v875 = vfloor.f32 %v811
        %v876 = vfloor.f32 %v812
        %v877 = vfloor.f32 %v813
        %v878 = vfloor.f32 %v814
        %v879 = vfloor.f32 %v815
        %v880 = vfloor.f32 %v816
        %v881 = vfloor.f32 %v817
        %v882 = vfloor.f32 %v818
        %v883 = vfloor.f32 %v819
        %v884 = vfloor.f32 %v820
        %v885 = vfloor.f32 %v821
        %v886 = vfloor.f32 %v822
        %v887 = vfloor.f32 %v823
        %v888 = vfloor.f32 %v824
        %v889 = vfloor.f32 %v825
        %v890 = vfloor.f32 %v826
        %v891 = vfloor.f32 %v827
        %v892 = vfloor.f32 %v828
        %v893 = vfloor.f32 %v829
        %v894 = vfloor.f32 %v830
        %v895 = vfloor.f32 %v831
        %v896 = vfloor.f32 %v832
        %v897 = vfloor.f32 %v833
        %v898 = vfloor.f32 %v834
        %v899 = vfloor.f32 %v835
        %v900 = vfloor.f32 %v836
        %v901 = vfloor.f32 %v837
        %v902 = vfloor.f32 %v838
        %v903 = vfloor.f32 %v839
        %v904 = vfloor.f32 %v840
        %v905 = vfloor.f32 %v841
        %v906 = vfloor.f32 %v842
        %v907 = vfloor.f32 %v843
        %v908 = vfloor.f32 %v844
        %v909 = vfloor.f32 %v845
        %v910 = vfloor.f32 %v846
        %v911 = vfloor.f32 %v847
        %v912 = vfloor.f32 %v848
        %v913 = vfloor.f32 %v849
        %v914 = vfloor.f32 %v850
        %v915 = vfloor.f32 %v851
        %v916 = vfloor.f32 %v852
        %v917 = vfloor.f32 %v853
        %v918 = vfloor.f32 %v854
        %v919 = vfloor.f32 %v855
        %v920 = vfloor.f32 %v856
        %v921 = vfloor.f32 %v857
        %v922 = vfloor.f32 %v858
        %v923 = vfloor.f32 %v859
        %v924 = vfloor.f32 %v860
        %v925 = vfloor.f32 %v861
        %v926 = vfloor.f32 %v862
        %v927 = vfloor.f32 %v863
        %v928 = vfloor.f32 %v864
        %v929 = vfloor.f32 %v865
        %v930 = vfloor.f32 %v866
        %v931 = vfloor.f32 %v867
        %v932 = vfloor.f32 %v868
        %v933 = vadd.f32 %v869, 4.0
        %v934 = vadd.f32 %v870, 4.0
        %v935 = vadd.f32 %v871, 4.0
        %v936 = vadd.f32 %v872, 4.0
        %v937 = vadd.f32 %v873, 4.0
        %v938 = vadd.f32 %v874, 4.0
        %v939 = vadd.f32 %v875, 4.0
        %v940 = vadd.f32 %v876, 4.0
        %v941 = vadd.f32 %v877, 4.0
        %v942 = vadd.f32 %v878, 4.0
        %v943 = vadd.f32 %v879, 4.0
        %v944 = vadd.f32 %v880, 4.0
        %v945 = vadd.f32 %v881, 4.0
        %v946 = vadd.f32 %v882, 4.0
        %v947 = vadd.f32 %v883, 4.0
        %v948 = vadd.f32 %v884, 4.0
        %v949 = vadd.f32 %v885, 4.0
        %v950 = vadd.f32 %v886, 4.0
        %v951 = vadd.f32 %v887, 4.0
        %v952 = vadd.f32 %v888, 4.0
        %v953 = vadd.f32 %v889, 4.0
        %v954 = vadd.f32 %v890, 4.0
        %v955 = vadd.f32 %v891, 4.0
        %v956 = vadd.f32 %v892, 4.0
        %v957 = vadd.f32 %v893, 4.0
        %v958 = vadd.f32 %v894, 4.0
        %v959 = vadd.f32 %v895, 4.0
        %v960 = vadd.f32 %v896, 4.0
        %v961 = vadd.f32 %v897, 4.0
        %v962 = vadd.f32 %v898, 4.0
        %v963 = vadd.f32 %v899, 4.0
        %v964 = vadd.f32 %v900, 4.0
        %v965 = vadd.f32 %v901, 4.0
        %v966 = vadd.f32 %v902, 4.0
        %v967 = vadd.f32 %v903, 4.0
        %v968 = vadd.f32 %v904, 4.0
        %v969 = vadd.f32 %v905, 4.0
        %v970 = vadd.f32 %v906, 4.0
        %v971 = vadd.f32 %v907, 4.0
        %v972 = vadd.f32 %v908, 4.0
        %v973 = vadd.f32 %v909, 4.0
        %v974 = vadd.f32 %v910, 4.0
        %v975 = vadd.f32 %v911, 4.0
        %v976 = vadd.f32 %v912, 4.0
        %v977 = vadd.f32 %v913, 4.0
        %v978 = vadd.f32 %v914, 4.0
        %v979 = vadd.f32 %v915, 4.0
        %v980 = vadd.f32 %v916, 4.0
        %v981 = vadd.f32 %v917, 4.0
        %v982 = vadd.f32 %v918, 4.0
        %v983 = vadd.f32 %v919, 4.0
        %v984 = vadd.f32 %v920, 4.0
        %v985 = vadd.f32 %v921, 4.0
        %v986 = vadd.f32 %v922, 4.0
        %v987 = vadd.f32 %v923, 4.0
        %v988 = vadd.f32 %v924, 4.0
        %v989 = vadd.f32 %v925, 4.0
        %v990 = vadd.f32 %v926, 4.0
        %v991 = vadd.f32 %v927, 4.0
        %v992 = vadd.f32 %v928, 4.0
        %v993 = vadd.f32 %v929, 4.0
        %v994 = vadd.f32 %v930, 4.0
        %v995 = vadd.f32 %v931, 4.0
        %v996 = vadd.f32 %v932, 4.0
        %v997 = vld [vmem:[#allocation7] sm:$0xff]
        %v998 = vld [vmem:[#allocation7 + $0x8] sm:$0xff]
        %v999 = vld [vmem:[#allocation7 + $0x10] sm:$0xff]
        %v1000 = vld [vmem:[#allocation7 + $0x18] sm:$0xff]
        %v1001 = vld [vmem:[#allocation7 + $0x20] sm:$0xff]
        %v1002 = vld [vmem:[#allocation7 + $0x28] sm:$0xff]
        %v1003 = vld [vmem:[#allocation7 + $0x30] sm:$0xff]
        %v1004 = vld [vmem:[#allocation7 + $0x38] sm:$0xff]
        %v1005 = vld [vmem:[#allocation7 + $0x40] sm:$0xff]
        %v1006 = vld [vmem:[#allocation7 + $0x48] sm:$0xff]
        %v1007 = vld [vmem:[#allocation7 + $0x50] sm:$0xff]
        %v1008 = vld [vmem:[#allocation7 + $0x58] sm:$0xff]
        %v1009 = vld [vmem:[#allocation7 + $0x60] sm:$0xff]
        %v1010 = vld [vmem:[#allocation7 + $0x68] sm:$0xff]
        %v1011 = vld [vmem:[#allocation7 + $0x70] sm:$0xff]
        %v1012 = vld [vmem:[#allocation7 + $0x78] sm:$0xff]
        %v1013 = vld [vmem:[#allocation7 + $0x80] sm:$0xff]
        %v1014 = vld [vmem:[#allocation7 + $0x88] sm:$0xff]
        %v1015 = vld [vmem:[#allocation7 + $0x90] sm:$0xff]
        %v1016 = vld [vmem:[#allocation7 + $0x98] sm:$0xff]
        %v1017 = vld [vmem:[#allocation7 + $0xa0] sm:$0xff]
        %v1018 = vld [vmem:[#allocation7 + $0xa8] sm:$0xff]
        %v1019 = vld [vmem:[#allocation7 + $0xb0] sm:$0xff]
        %v1020 = vld [vmem:[#allocation7 + $0xb8] sm:$0xff]
        %v1021 = vld [vmem:[#allocation7 + $0xc0] sm:$0xff]
        %v1022 = vld [vmem:[#allocation7 + $0xc8] sm:$0xff]
        %v1023 = vld [vmem:[#allocation7 + $0xd0] sm:$0xff]
        %v1024 = vld [vmem:[#allocation7 + $0xd8] sm:$0xff]
        %v1025 = vld [vmem:[#allocation7 + $0xe0] sm:$0xff]
        %v1026 = vld [vmem:[#allocation7 + $0xe8] sm:$0xff]
        %v1027 = vld [vmem:[#allocation7 + $0xf0] sm:$0xff]
        %v1028 = vld [vmem:[#allocation7 + $0xf8] sm:$0xff]
        %v1029 = vld [vmem:[#allocation7 + $0x100] sm:$0xff]
        %v1030 = vld [vmem:[#allocation7 + $0x108] sm:$0xff]
        %v1031 = vld [vmem:[#allocation7 + $0x110] sm:$0xff]
        %v1032 = vld [vmem:[#allocation7 + $0x118] sm:$0xff]
        %v1033 = vld [vmem:[#allocation7 + $0x120] sm:$0xff]
        %v1034 = vld [vmem:[#allocation7 + $0x128] sm:$0xff]
        %v1035 = vld [vmem:[#allocation7 + $0x130] sm:$0xff]
        %v1036 = vld [vmem:[#allocation7 + $0x138] sm:$0xff]
        %v1037 = vld [vmem:[#allocation7 + $0x140] sm:$0xff]
        %v1038 = vld [vmem:[#allocation7 + $0x148] sm:$0xff]
        %v1039 = vld [vmem:[#allocation7 + $0x150] sm:$0xff]
        %v1040 = vld [vmem:[#allocation7 + $0x158] sm:$0xff]
        %v1041 = vld [vmem:[#allocation7 + $0x160] sm:$0xff]
        %v1042 = vld [vmem:[#allocation7 + $0x168] sm:$0xff]
        %v1043 = vld [vmem:[#allocation7 + $0x170] sm:$0xff]
        %v1044 = vld [vmem:[#allocation7 + $0x178] sm:$0xff]
        %v1045 = vld [vmem:[#allocation7 + $0x180] sm:$0xff]
        %v1046 = vld [vmem:[#allocation7 + $0x188] sm:$0xff]
        %v1047 = vld [vmem:[#allocation7 + $0x190] sm:$0xff]
        %v1048 = vld [vmem:[#allocation7 + $0x198] sm:$0xff]
        %v1049 = vld [vmem:[#allocation7 + $0x1a0] sm:$0xff]
        %v1050 = vld [vmem:[#allocation7 + $0x1a8] sm:$0xff]
        %v1051 = vld [vmem:[#allocation7 + $0x1b0] sm:$0xff]
        %v1052 = vld [vmem:[#allocation7 + $0x1b8] sm:$0xff]
        %v1053 = vld [vmem:[#allocation7 + $0x1c0] sm:$0xff]
        %v1054 = vld [vmem:[#allocation7 + $0x1c8] sm:$0xff]
        %v1055 = vld [vmem:[#allocation7 + $0x1d0] sm:$0xff]
        %v1056 = vld [vmem:[#allocation7 + $0x1d8] sm:$0xff]
        %v1057 = vld [vmem:[#allocation7 + $0x1e0] sm:$0xff]
        %v1058 = vld [vmem:[#allocation7 + $0x1e8] sm:$0xff]
        %v1059 = vld [vmem:[#allocation7 + $0x1f0] sm:$0xff]
        %v1060 = vld [vmem:[#allocation7 + $0x1f8] sm:$0xff]
        %1061 = vmatprep.subr.mxu0 0.0
        %1062 = vmatpush1.msra.mxu0 %v997
        %1063 = vmatprep.subr.mxu0 0.0
        %1064 = vmatpush1.msra.mxu0 %v998
        %1065 = vmatprep.subr.mxu0 0.0
        %1066 = vmatpush1.msra.mxu0 %v999
        %1067 = vmatprep.subr.mxu0 0.0
        %1068 = vmatpush1.msra.mxu0 %v1000
        %1069 = vmatprep.subr.mxu0 0.0
        %1070 = vmatpush1.msra.mxu0 %v1001
        %1071 = vmatprep.subr.mxu0 0.0
        %1072 = vmatpush1.msra.mxu0 %v1002
        %1073 = vmatprep.subr.mxu0 0.0
        %1074 = vmatpush1.msra.mxu0 %v1003
        %1075 = vmatprep.subr.mxu0 0.0
        %1076 = vmatpush1.msra.mxu0 %v1004
        %1077 = vmatprep.subr.mxu0 0.0
        %1078 = vmatpush1.msra.mxu0 %v1005
        %1079 = vmatprep.subr.mxu0 0.0
        %1080 = vmatpush1.msra.mxu0 %v1006
        %1081 = vmatprep.subr.mxu0 0.0
        %1082 = vmatpush1.msra.mxu0 %v1007
        %1083 = vmatprep.subr.mxu0 0.0
        %1084 = vmatpush1.msra.mxu0 %v1008
        %1085 = vmatprep.subr.mxu0 0.0
        %1086 = vmatpush1.msra.mxu0 %v1009
        %1087 = vmatprep.subr.mxu0 0.0
        %1088 = vmatpush1.msra.mxu0 %v1010
        %1089 = vmatprep.subr.mxu0 0.0
        %1090 = vmatpush1.msra.mxu0 %v1011
        %1091 = vmatprep.subr.mxu0 0.0
        %1092 = vmatpush1.msra.mxu0 %v1012
        %1093 = vmatprep.subr.mxu0 0.0
        %1094 = vmatpush1.msra.mxu0 %v1013
        %1095 = vmatprep.subr.mxu0 0.0
        %1096 = vmatpush1.msra.mxu0 %v1014
        %1097 = vmatprep.subr.mxu0 0.0
        %1098 = vmatpush1.msra.mxu0 %v1015
        %1099 = vmatprep.subr.mxu0 0.0
        %1100 = vmatpush1.msra.mxu0 %v1016
        %1101 = vmatprep.subr.mxu0 0.0
        %1102 = vmatpush1.msra.mxu0 %v1017
        %1103 = vmatprep.subr.mxu0 0.0
        %1104 = vmatpush1.msra.mxu0 %v1018
        %1105 = vmatprep.subr.mxu0 0.0
        %1106 = vmatpush1.msra.mxu0 %v1019
        %1107 = vmatprep.subr.mxu0 0.0
        %1108 = vmatpush1.msra.mxu0 %v1020
        %1109 = vmatprep.subr.mxu0 0.0
        %1110 = vmatpush1.msra.mxu0 %v1021
        %1111 = vmatprep.subr.mxu0 0.0
        %1112 = vmatpush1.msra.mxu0 %v1022
        %1113 = vmatprep.subr.mxu0 0.0
        %1114 = vmatpush1.msra.mxu0 %v1023
        %1115 = vmatprep.subr.mxu0 0.0
        %1116 = vmatpush1.msra.mxu0 %v1024
        %1117 = vmatprep.subr.mxu0 0.0
        %1118 = vmatpush1.msra.mxu0 %v1025
        %1119 = vmatprep.subr.mxu0 0.0
        %1120 = vmatpush1.msra.mxu0 %v1026
        %1121 = vmatprep.subr.mxu0 0.0
        %1122 = vmatpush1.msra.mxu0 %v1027
        %1123 = vmatprep.subr.mxu0 0.0
        %1124 = vmatpush1.msra.mxu0 %v1028
        %1125 = vmatprep.mubr.f32.mxu0 %v934
        %1126 = vmatmul.mubr.f32.gmra.mrb[0].mxu0 %v933
        %v1127 = vpop.f32.mrb[0].mxu0
        %v1128 = vadd.f32 3.0, %v1127
        %v1129 = vpop.f32.mrb[0].mxu0
        %1130 = vmatprep.mubr.f32.mxu0 %v938
        %1131 = vmatmul.mubr.f32.gmra.mrb[0].mxu0 %v937
        %v1132 = vpop.f32.mrb[0].mxu0
        %v1133 = vadd.f32 3.0, %v1132
        %v1134 = vpop.f32.mrb[0].mxu0
        %1135 = vmatprep.mubr.f32.mxu0 %v942
        %1136 = vmatmul.mubr.f32.gmra.mrb[0].mxu0 %v941
        %v1137 = vpop.f32.mrb[0].mxu0
        %v1138 = vadd.f32 3.0, %v1137
        %v1139 = vpop.f32.mrb[0].mxu0
        %1140 = vmatprep.mubr.f32.mxu0 %v946
        %1141 = vmatmul.mubr.f32.gmra.mrb[0].mxu0 %v945
        %v1142 = vpop.f32.mrb[0].mxu0
        %v1143 = vadd.f32 3.0, %v1142
        %v1144 = vpop.f32.mrb[0].mxu0
        %1145 = vmatprep.mubr.f32.mxu0 %v950
        %1146 = vmatmul.mubr.f32.gmra.mrb[0].mxu0 %v949
        %v1147 = vpop.f32.mrb[0].mxu0
        %v1148 = vadd.f32 3.0, %v1147
        %v1149 = vpop.f32.mrb[0].mxu0
        %1150 = vmatprep.mubr.f32.mxu0 %v954
        %1151 = vmatmul.mubr.f32.gmra.mrb[0].mxu0 %v953
        %v1152 = vpop.f32.mrb[0].mxu0
        %v1153 = vadd.f32 3.0, %v1152
        %v1154 = vpop.f32.mrb[0].mxu0
        %1155 = vmatprep.mubr.f32.mxu0 %v958
        %1156 = vmatmul.mubr.f32.gmra.mrb[0].mxu0 %v957
        %v1157 = vpop.f32.mrb[0].mxu0
        %v1158 = vadd.f32 3.0, %v1157
        %v1159 = vpop.f32.mrb[0].mxu0
        %1160 = vmatprep.mubr.f32.mxu0 %v962
        %1161 = vmatmul.mubr.f32.gmra.mrb[0].mxu0 %v961
        %v1162 = vpop.f32.mrb[0].mxu0
        %v1163 = vadd.f32 3.0, %v1162
        %v1164 = vpop.f32.mrb[0].mxu0
        %1165 = vmatprep.mubr.f32.mxu0 %v966
        %1166 = vmatmul.mubr.f32.gmra.mrb[0].mxu0 %v965
        %v1167 = vpop.f32.mrb[0].mxu0
        %v1168 = vadd.f32 3.0, %v1167
        %v1169 = vpop.f32.mrb[0].mxu0
        %1170 = vmatprep.mubr.f32.mxu0 %v970
        %1171 = vmatmul.mubr.f32.gmra.mrb[0].mxu0 %v969
        %v1172 = vpop.f32.mrb[0].mxu0
        %v1173 = vadd.f32 3.0, %v1172
        %v1174 = vpop.f32.mrb[0].mxu0
        %1175 = vmatprep.mubr.f32.mxu0 %v974
        %1176 = vmatmul.mubr.f32.gmra.mrb[0].mxu0 %v973
        %v1177 = vpop.f32.mrb[0].mxu0
        %v1178 = vadd.f32 3.0, %v1177
        %v1179 = vpop.f32.mrb[0].mxu0
        %1180 = vmatprep.mubr.f32.mxu0 %v978
        %1181 = vmatmul.mubr.f32.gmra.mrb[0].mxu0 %v977
        %v1182 = vpop.f32.mrb[0].mxu0
        %v1183 = vadd.f32 3.0, %v1182
        %v1184 = vpop.f32.mrb[0].mxu0
        %1185 = vmatprep.mubr.f32.mxu0 %v982
        %1186 = vmatmul.mubr.f32.gmra.mrb[0].mxu0 %v981
        %v1187 = vpop.f32.mrb[0].mxu0
        %v1188 = vadd.f32 3.0, %v1187
        %v1189 = vpop.f32.mrb[0].mxu0
        %1190 = vmatprep.mubr.f32.mxu0 %v986
        %1191 = vmatmul.mubr.f32.gmra.mrb[0].mxu0 %v985
        %v1192 = vpop.f32.mrb[0].mxu0
        %v1193 = vadd.f32 3.0, %v1192
        %v1194 = vpop.f32.mrb[0].mxu0
        %1195 = vmatprep.mubr.f32.mxu0 %v990
        %1196 = vmatmul.mubr.f32.gmra.mrb[0].mxu0 %v989
        %v1197 = vpop.f32.mrb[0].mxu0
        %v1198 = vadd.f32 3.0, %v1197
        %v1199 = vpop.f32.mrb[0].mxu0
        %1200 = vmatprep.mubr.f32.mxu0 %v994
        %1201 = vmatmul.mubr.f32.gmra.mrb[0].mxu0 %v993
        %v1202 = vpop.f32.mrb[0].mxu0
        %v1203 = vadd.f32 3.0, %v1202
        %v1204 = vpop.f32.mrb[0].mxu0
        %1205 = vdwg.mxu0
        %1206 = vmatprep.subr.mxu0 0.0
        %1207 = vmatpush1.msra.mxu0 %v1029
        %1208 = vmatprep.subr.mxu0 0.0
        %1209 = vmatpush1.msra.mxu0 %v1030
        %1210 = vmatprep.subr.mxu0 0.0
        %1211 = vmatpush1.msra.mxu0 %v1031
        %1212 = vmatprep.subr.mxu0 0.0
        %1213 = vmatpush1.msra.mxu0 %v1032
        %1214 = vmatprep.subr.mxu0 0.0
        %1215 = vmatpush1.msra.mxu0 %v1033
        %1216 = vmatprep.subr.mxu0 0.0
        %1217 = vmatpush1.msra.mxu0 %v1034
        %1218 = vmatprep.subr.mxu0 0.0
        %1219 = vmatpush1.msra.mxu0 %v1035
        %1220 = vmatprep.subr.mxu0 0.0
        %1221 = vmatpush1.msra.mxu0 %v1036
        %1222 = vmatprep.subr.mxu0 0.0
        %1223 = vmatpush1.msra.mxu0 %v1037
        %1224 = vmatprep.subr.mxu0 0.0
        %1225 = vmatpush1.msra.mxu0 %v1038
        %1226 = vmatprep.subr.mxu0 0.0
        %1227 = vmatpush1.msra.mxu0 %v1039
        %1228 = vmatprep.subr.mxu0 0.0
        %1229 = vmatpush1.msra.mxu0 %v1040
        %1230 = vmatprep.subr.mxu0 0.0
        %1231 = vmatpush1.msra.mxu0 %v1041
        %1232 = vmatprep.subr.mxu0 0.0
        %1233 = vmatpush1.msra.mxu0 %v1042
        %1234 = vmatprep.subr.mxu0 0.0
        %1235 = vmatpush1.msra.mxu0 %v1043
        %1236 = vmatprep.subr.mxu0 0.0
        %1237 = vmatpush1.msra.mxu0 %v1044
        %1238 = vmatprep.subr.mxu0 0.0
        %1239 = vmatpush1.msra.mxu0 %v1045
        %1240 = vmatprep.subr.mxu0 0.0
        %1241 = vmatpush1.msra.mxu0 %v1046
        %1242 = vmatprep.subr.mxu0 0.0
        %1243 = vmatpush1.msra.mxu0 %v1047
        %1244 = vmatprep.subr.mxu0 0.0
        %1245 = vmatpush1.msra.mxu0 %v1048
        %1246 = vmatprep.subr.mxu0 0.0
        %1247 = vmatpush1.msra.mxu0 %v1049
        %1248 = vmatprep.subr.mxu0 0.0
        %1249 = vmatpush1.msra.mxu0 %v1050
        %1250 = vmatprep.subr.mxu0 0.0
        %1251 = vmatpush1.msra.mxu0 %v1051
        %1252 = vmatprep.subr.mxu0 0.0
        %1253 = vmatpush1.msra.mxu0 %v1052
        %1254 = vmatprep.subr.mxu0 0.0
        %1255 = vmatpush1.msra.mxu0 %v1053
        %1256 = vmatprep.subr.mxu0 0.0
        %1257 = vmatpush1.msra.mxu0 %v1054
        %1258 = vmatprep.subr.mxu0 0.0
        %1259 = vmatpush1.msra.mxu0 %v1055
        %1260 = vmatprep.subr.mxu0 0.0
        %1261 = vmatpush1.msra.mxu0 %v1056
        %1262 = vmatprep.subr.mxu0 0.0
        %1263 = vmatpush1.msra.mxu0 %v1057
        %1264 = vmatprep.subr.mxu0 0.0
        %1265 = vmatpush1.msra.mxu0 %v1058
        %1266 = vmatprep.subr.mxu0 0.0
        %1267 = vmatpush1.msra.mxu0 %v1059
        %1268 = vmatprep.subr.mxu0 0.0
        %1269 = vmatpush1.msra.mxu0 %v1060
        %1270 = vmatprep.mubr.f32.mxu0 %v936
        %1271 = vmatmul.mubr.f32.gmra.mrb[0].mxu0 %v935
        %v1272 = vpop.f32.mrb[0].mxu0
        %v1273 = vadd.f32 %v1128, %v1272
        %v1274 = vpop.f32.mrb[0].mxu0
        %1275 = vmatprep.mubr.f32.mxu0 %v940
        %1276 = vmatmul.mubr.f32.gmra.mrb[0].mxu0 %v939
        %v1277 = vpop.f32.mrb[0].mxu0
        %v1278 = vadd.f32 %v1133, %v1277
        %v1279 = vpop.f32.mrb[0].mxu0
        %1280 = vmatprep.mubr.f32.mxu0 %v944
        %1281 = vmatmul.mubr.f32.gmra.mrb[0].mxu0 %v943
        %v1282 = vpop.f32.mrb[0].mxu0
        %v1283 = vadd.f32 %v1138, %v1282
        %v1284 = vpop.f32.mrb[0].mxu0
        %1285 = vmatprep.mubr.f32.mxu0 %v948
        %1286 = vmatmul.mubr.f32.gmra.mrb[0].mxu0 %v947
        %v1287 = vpop.f32.mrb[0].mxu0
        %v1288 = vadd.f32 %v1143, %v1287
        %v1289 = vpop.f32.mrb[0].mxu0
        %1290 = vmatprep.mubr.f32.mxu0 %v952
        %1291 = vmatmul.mubr.f32.gmra.mrb[0].mxu0 %v951
        %v1292 = vpop.f32.mrb[0].mxu0
        %v1293 = vadd.f32 %v1148, %v1292
        %v1294 = vpop.f32.mrb[0].mxu0
        %1295 = vmatprep.mubr.f32.mxu0 %v956
        %1296 = vmatmul.mubr.f32.gmra.mrb[0].mxu0 %v955
        %v1297 = vpop.f32.mrb[0].mxu0
        %v1298 = vadd.f32 %v1153, %v1297
        %v1299 = vpop.f32.mrb[0].mxu0
        %1300 = vmatprep.mubr.f32.mxu0 %v960
        %1301 = vmatmul.mubr.f32.gmra.mrb[0].mxu0 %v959
        %v1302 = vpop.f32.mrb[0].mxu0
        %v1303 = vadd.f32 %v1158, %v1302
        %v1304 = vpop.f32.mrb[0].mxu0
        %1305 = vmatprep.mubr.f32.mxu0 %v964
        %1306 = vmatmul.mubr.f32.gmra.mrb[0].mxu0 %v963
        %v1307 = vpop.f32.mrb[0].mxu0
        %v1308 = vadd.f32 %v1163, %v1307
        %v1309 = vpop.f32.mrb[0].mxu0
        %1310 = vmatprep.mubr.f32.mxu0 %v968
        %1311 = vmatmul.mubr.f32.gmra.mrb[0].mxu0 %v967
        %v1312 = vpop.f32.mrb[0].mxu0
        %v1313 = vadd.f32 %v1168, %v1312
        %v1314 = vpop.f32.mrb[0].mxu0
        %1315 = vmatprep.mubr.f32.mxu0 %v972
        %1316 = vmatmul.mubr.f32.gmra.mrb[0].mxu0 %v971
        %v1317 = vpop.f32.mrb[0].mxu0
        %v1318 = vadd.f32 %v1173, %v1317
        %v1319 = vpop.f32.mrb[0].mxu0
        %1320 = vmatprep.mubr.f32.mxu0 %v976
        %1321 = vmatmul.mubr.f32.gmra.mrb[0].mxu0 %v975
        %v1322 = vpop.f32.mrb[0].mxu0
        %v1323 = vadd.f32 %v1178, %v1322
        %v1324 = vpop.f32.mrb[0].mxu0
        %1325 = vmatprep.mubr.f32.mxu0 %v980
        %1326 = vmatmul.mubr.f32.gmra.mrb[0].mxu0 %v979
        %v1327 = vpop.f32.mrb[0].mxu0
        %v1328 = vadd.f32 %v1183, %v1327
        %v1329 = vpop.f32.mrb[0].mxu0
        %1330 = vmatprep.mubr.f32.mxu0 %v984
        %1331 = vmatmul.mubr.f32.gmra.mrb[0].mxu0 %v983
        %v1332 = vpop.f32.mrb[0].mxu0
        %v1333 = vadd.f32 %v1188, %v1332
        %v1334 = vpop.f32.mrb[0].mxu0
        %1335 = vmatprep.mubr.f32.mxu0 %v988
        %1336 = vmatmul.mubr.f32.gmra.mrb[0].mxu0 %v987
        %v1337 = vpop.f32.mrb[0].mxu0
        %v1338 = vadd.f32 %v1193, %v1337
        %v1339 = vpop.f32.mrb[0].mxu0
        %1340 = vmatprep.mubr.f32.mxu0 %v992
        %1341 = vmatmul.mubr.f32.gmra.mrb[0].mxu0 %v991
        %v1342 = vpop.f32.mrb[0].mxu0
        %v1343 = vadd.f32 %v1198, %v1342
        %v1344 = vpop.f32.mrb[0].mxu0
        %1345 = vmatprep.mubr.f32.mxu0 %v996
        %1346 = vmatmul.mubr.f32.gmra.mrb[0].mxu0 %v995
        %v1347 = vpop.f32.mrb[0].mxu0
        %v1348 = vadd.f32 %v1203, %v1347
        %v1349 = vpop.f32.mrb[0].mxu0
        %1350 = vdwg.mxu0
        %v1351 = vmax.f32 %v1273, 0.0
        %v1352 = vmax.f32 %v1278, 0.0
        %v1353 = vmax.f32 %v1283, 0.0
        %v1354 = vmax.f32 %v1288, 0.0
        %v1355 = vmax.f32 %v1293, 0.0
        %v1356 = vmax.f32 %v1298, 0.0
        %v1357 = vmax.f32 %v1303, 0.0
        %v1358 = vmax.f32 %v1308, 0.0
        %v1359 = vmax.f32 %v1313, 0.0
        %v1360 = vmax.f32 %v1318, 0.0
        %v1361 = vmax.f32 %v1323, 0.0
        %v1362 = vmax.f32 %v1328, 0.0
        %v1363 = vmax.f32 %v1333, 0.0
        %v1364 = vmax.f32 %v1338, 0.0
        %v1365 = vmax.f32 %v1343, 0.0
        %v1366 = vmax.f32 %v1348, 0.0
        %v1367 = vmul.f32 %v1351, 0.00048828125
        %v1368 = vmul.f32 %v1352, 0.00048828125
        %v1369 = vmul.f32 %v1353, 0.00048828125
        %v1370 = vmul.f32 %v1354, 0.00048828125
        %v1371 = vmul.f32 %v1355, 0.00048828125
        %v1372 = vmul.f32 %v1356, 0.00048828125
        %v1373 = vmul.f32 %v1357, 0.00048828125
        %v1374 = vmul.f32 %v1358, 0.00048828125
        %v1375 = vmul.f32 %v1359, 0.00048828125
        %v1376 = vmul.f32 %v1360, 0.00048828125
        %v1377 = vmul.f32 %v1361, 0.00048828125
        %v1378 = vmul.f32 %v1362, 0.00048828125
        %v1379 = vmul.f32 %v1363, 0.00048828125
        %v1380 = vmul.f32 %v1364, 0.00048828125
        %v1381 = vmul.f32 %v1365, 0.00048828125
        %v1382 = vmul.f32 %v1366, 0.00048828125
        %v1383 = vfloor.f32 %v1367
        %v1384 = vfloor.f32 %v1368
        %v1385 = vfloor.f32 %v1369
        %v1386 = vfloor.f32 %v1370
        %v1387 = vfloor.f32 %v1371
        %v1388 = vfloor.f32 %v1372
        %v1389 = vfloor.f32 %v1373
        %v1390 = vfloor.f32 %v1374
        %v1391 = vfloor.f32 %v1375
        %v1392 = vfloor.f32 %v1376
        %v1393 = vfloor.f32 %v1377
        %v1394 = vfloor.f32 %v1378
        %v1395 = vfloor.f32 %v1379
        %v1396 = vfloor.f32 %v1380
        %v1397 = vfloor.f32 %v1381
        %v1398 = vfloor.f32 %v1382
        %v1399 = vadd.f32 %v1383, 4.0
        %v1400 = vadd.f32 %v1384, 4.0
        %v1401 = vadd.f32 %v1385, 4.0
        %v1402 = vadd.f32 %v1386, 4.0
        %v1403 = vadd.f32 %v1387, 4.0
        %v1404 = vadd.f32 %v1388, 4.0
        %v1405 = vadd.f32 %v1389, 4.0
        %v1406 = vadd.f32 %v1390, 4.0
        %v1407 = vadd.f32 %v1391, 4.0
        %v1408 = vadd.f32 %v1392, 4.0
        %v1409 = vadd.f32 %v1393, 4.0
        %v1410 = vadd.f32 %v1394, 4.0
        %v1411 = vadd.f32 %v1395, 4.0
        %v1412 = vadd.f32 %v1396, 4.0
        %v1413 = vadd.f32 %v1397, 4.0
        %v1414 = vadd.f32 %v1398, 4.0
        %v1415 = vld [vmem:[#allocation8] sm:$0xff]
        %v1416 = vld [vmem:[#allocation8 + $0x8] sm:$0xff]
        %v1417 = vld [vmem:[#allocation8 + $0x10] sm:$0xff]
        %v1418 = vld [vmem:[#allocation8 + $0x18] sm:$0xff]
        %v1419 = vld [vmem:[#allocation8 + $0x20] sm:$0xff]
        %v1420 = vld [vmem:[#allocation8 + $0x28] sm:$0xff]
        %v1421 = vld [vmem:[#allocation8 + $0x30] sm:$0xff]
        %v1422 = vld [vmem:[#allocation8 + $0x38] sm:$0xff]
        %v1423 = vld [vmem:[#allocation8 + $0x40] sm:$0xff]
        %v1424 = vld [vmem:[#allocation8 + $0x48] sm:$0xff]
        %v1425 = vld [vmem:[#allocation8 + $0x50] sm:$0xff]
        %v1426 = vld [vmem:[#allocation8 + $0x58] sm:$0xff]
        %v1427 = vld [vmem:[#allocation8 + $0x60] sm:$0xff]
        %v1428 = vld [vmem:[#allocation8 + $0x68] sm:$0xff]
        %v1429 = vld [vmem:[#allocation8 + $0x70] sm:$0xff]
        %v1430 = vld [vmem:[#allocation8 + $0x78] sm:$0xff]
        %v1431 = vld [vmem:[%s4] sm:$0x1]
        %v1433 = vlaneseq
        %v1434 = vshrl.u32 %v1433, 7
        %v1435 = vsub.s32 0, %v1434
        %v1436 = vrot.slane %v1431, %v1435
        %1438 = vmatprep.subr.mxu0 0.0
        %1439 = vmatpush1.msra.mxu0 %v1415
        %1440 = vmatprep.subr.mxu0 0.0
        %1441 = vmatpush1.msra.mxu0 %v1416
        %1442 = vmatprep.subr.mxu0 0.0
        %1443 = vmatpush1.msra.mxu0 %v1417
        %1444 = vmatprep.subr.mxu0 0.0
        %1445 = vmatpush1.msra.mxu0 %v1418
        %1446 = vmatprep.subr.mxu0 0.0
        %1447 = vmatpush1.msra.mxu0 %v1419
        %1448 = vmatprep.subr.mxu0 0.0
        %1449 = vmatpush1.msra.mxu0 %v1420
        %1450 = vmatprep.subr.mxu0 0.0
        %1451 = vmatpush1.msra.mxu0 %v1421
        %1452 = vmatprep.subr.mxu0 0.0
        %1453 = vmatpush1.msra.mxu0 %v1422
        %1454 = vmatprep.subr.mxu0 0.0
        %1455 = vmatpush1.msra.mxu0 %v1423
        %1456 = vmatprep.subr.mxu0 0.0
        %1457 = vmatpush1.msra.mxu0 %v1424
        %1458 = vmatprep.subr.mxu0 0.0
        %1459 = vmatpush1.msra.mxu0 %v1425
        %1460 = vmatprep.subr.mxu0 0.0
        %1461 = vmatpush1.msra.mxu0 %v1426
        %1462 = vmatprep.subr.mxu0 0.0
        %1463 = vmatpush1.msra.mxu0 %v1427
        %1464 = vmatprep.subr.mxu0 0.0
        %1465 = vmatpush1.msra.mxu0 %v1428
        %1466 = vmatprep.subr.mxu0 0.0
        %1467 = vmatpush1.msra.mxu0 %v1429
        %1468 = vmatprep.subr.mxu0 0.0
        %1469 = vmatpush1.msra.mxu0 %v1430
        %1470 = vmatprep.subr.mxu0 0.0
        %1471 = vmatpush1.msra.mxu0 0.0
        %1472 = vmatprep.subr.mxu0 0.0
        %1473 = vmatpush1.msra.mxu0 0.0
        %1474 = vmatprep.subr.mxu0 0.0
        %1475 = vmatpush1.msra.mxu0 0.0
        %1476 = vmatprep.subr.mxu0 0.0
        %1477 = vmatpush1.msra.mxu0 0.0
        %1478 = vmatprep.subr.mxu0 0.0
        %1479 = vmatpush1.msra.mxu0 0.0
        %1480 = vmatprep.subr.mxu0 0.0
        %1481 = vmatpush1.msra.mxu0 0.0
        %1482 = vmatprep.subr.mxu0 0.0
        %1483 = vmatpush1.msra.mxu0 0.0
        %1484 = vmatprep.subr.mxu0 0.0
        %1485 = vmatpush1.msra.mxu0 0.0
        %1486 = vmatprep.subr.mxu0 0.0
        %1487 = vmatpush1.msra.mxu0 0.0
        %1488 = vmatprep.subr.mxu0 0.0
        %1489 = vmatpush1.msra.mxu0 0.0
        %1490 = vmatprep.subr.mxu0 0.0
        %1491 = vmatpush1.msra.mxu0 0.0
        %1492 = vmatprep.subr.mxu0 0.0
        %1493 = vmatpush1.msra.mxu0 0.0
        %1494 = vmatprep.subr.mxu0 0.0
        %1495 = vmatpush1.msra.mxu0 0.0
        %1496 = vmatprep.subr.mxu0 0.0
        %1497 = vmatpush1.msra.mxu0 0.0
        %1498 = vmatprep.subr.mxu0 0.0
        %1499 = vmatpush1.msra.mxu0 0.0
        %1500 = vmatprep.subr.mxu0 0.0
        %1501 = vmatpush1.msra.mxu0 0.0
        %1502 = vmatprep.mubr.f32.mxu0 0.0
        %1503 = vmatmul.mubr.f32.gmra.mrb[0].mxu0 %v1399
        %v1504 = vpop.f32.mrb[0].mxu0
        %v1505 = vadd.f32 %v1436, %v1504
        %v1506 = vpop.f32.mrb[0].mxu0
        %1507 = vmatprep.mubr.f32.mxu0 0.0
        %1508 = vmatmul.mubr.f32.gmra.mrb[0].mxu0 %v1400
        %v1509 = vpop.f32.mrb[0].mxu0
        %v1510 = vadd.f32 %v1436, %v1509
        %v1511 = vpop.f32.mrb[0].mxu0
        %1512 = vmatprep.mubr.f32.mxu0 0.0
        %1513 = vmatmul.mubr.f32.gmra.mrb[0].mxu0 %v1401
        %v1514 = vpop.f32.mrb[0].mxu0
        %v1515 = vadd.f32 %v1436, %v1514
        %v1516 = vpop.f32.mrb[0].mxu0
        %1517 = vmatprep.mubr.f32.mxu0 0.0
        %1518 = vmatmul.mubr.f32.gmra.mrb[0].mxu0 %v1402
        %v1519 = vpop.f32.mrb[0].mxu0
        %v1520 = vadd.f32 %v1436, %v1519
        %v1521 = vpop.f32.mrb[0].mxu0
        %1522 = vmatprep.mubr.f32.mxu0 0.0
        %1523 = vmatmul.mubr.f32.gmra.mrb[0].mxu0 %v1403
        %v1524 = vpop.f32.mrb[0].mxu0
        %v1525 = vadd.f32 %v1436, %v1524
        %v1526 = vpop.f32.mrb[0].mxu0
        %1527 = vmatprep.mubr.f32.mxu0 0.0
        %1528 = vmatmul.mubr.f32.gmra.mrb[0].mxu0 %v1404
        %v1529 = vpop.f32.mrb[0].mxu0
        %v1530 = vadd.f32 %v1436, %v1529
        %v1531 = vpop.f32.mrb[0].mxu0
        %1532 = vmatprep.mubr.f32.mxu0 0.0
        %1533 = vmatmul.mubr.f32.gmra.mrb[0].mxu0 %v1405
        %v1534 = vpop.f32.mrb[0].mxu0
        %v1535 = vadd.f32 %v1436, %v1534
        %v1536 = vpop.f32.mrb[0].mxu0
        %1537 = vmatprep.mubr.f32.mxu0 0.0
        %1538 = vmatmul.mubr.f32.gmra.mrb[0].mxu0 %v1406
        %v1539 = vpop.f32.mrb[0].mxu0
        %v1540 = vadd.f32 %v1436, %v1539
        %v1541 = vpop.f32.mrb[0].mxu0
        %1542 = vmatprep.mubr.f32.mxu0 0.0
        %1543 = vmatmul.mubr.f32.gmra.mrb[0].mxu0 %v1407
        %v1544 = vpop.f32.mrb[0].mxu0
        %v1545 = vadd.f32 %v1436, %v1544
        %v1546 = vpop.f32.mrb[0].mxu0
        %1547 = vmatprep.mubr.f32.mxu0 0.0
        %1548 = vmatmul.mubr.f32.gmra.mrb[0].mxu0 %v1408
        %v1549 = vpop.f32.mrb[0].mxu0
        %v1550 = vadd.f32 %v1436, %v1549
        %v1551 = vpop.f32.mrb[0].mxu0
        %1552 = vmatprep.mubr.f32.mxu0 0.0
        %1553 = vmatmul.mubr.f32.gmra.mrb[0].mxu0 %v1409
        %v1554 = vpop.f32.mrb[0].mxu0
        %v1555 = vadd.f32 %v1436, %v1554
        %v1556 = vpop.f32.mrb[0].mxu0
        %1557 = vmatprep.mubr.f32.mxu0 0.0
        %1558 = vmatmul.mubr.f32.gmra.mrb[0].mxu0 %v1410
        %v1559 = vpop.f32.mrb[0].mxu0
        %v1560 = vadd.f32 %v1436, %v1559
        %v1561 = vpop.f32.mrb[0].mxu0
        %1562 = vmatprep.mubr.f32.mxu0 0.0
        %1563 = vmatmul.mubr.f32.gmra.mrb[0].mxu0 %v1411
        %v1564 = vpop.f32.mrb[0].mxu0
        %v1565 = vadd.f32 %v1436, %v1564
        %v1566 = vpop.f32.mrb[0].mxu0
        %1567 = vmatprep.mubr.f32.mxu0 0.0
        %1568 = vmatmul.mubr.f32.gmra.mrb[0].mxu0 %v1412
        %v1569 = vpop.f32.mrb[0].mxu0
        %v1570 = vadd.f32 %v1436, %v1569
        %v1571 = vpop.f32.mrb[0].mxu0
        %1572 = vmatprep.mubr.f32.mxu0 0.0
        %1573 = vmatmul.mubr.f32.gmra.mrb[0].mxu0 %v1413
        %v1574 = vpop.f32.mrb[0].mxu0
        %v1575 = vadd.f32 %v1436, %v1574
        %v1576 = vpop.f32.mrb[0].mxu0
        %1577 = vmatprep.mubr.f32.mxu0 0.0
        %1578 = vmatmul.mubr.f32.gmra.mrb[0].mxu0 %v1414
        %v1579 = vpop.f32.mrb[0].mxu0
        %v1580 = vadd.f32 %v1436, %v1579
        %v1581 = vpop.f32.mrb[0].mxu0
        %1582 = vdwg.mxu0
        %1583 = vmax.xlane.f32.xlu0 %v1505
        %v1584 = vpop.xlane.xlu0 %1583
        %1585 = vmax.xlane.f32.xlu0 %v1510
        %v1586 = vpop.xlane.xlu0 %1585
        %1587 = vmax.xlane.f32.xlu0 %v1515
        %v1588 = vpop.xlane.xlu0 %1587
        %1589 = vmax.xlane.f32.xlu0 %v1520
        %v1590 = vpop.xlane.xlu0 %1589
        %1591 = vmax.xlane.f32.xlu0 %v1525
        %v1592 = vpop.xlane.xlu0 %1591
        %1593 = vmax.xlane.f32.xlu0 %v1530
        %v1594 = vpop.xlane.xlu0 %1593
        %1595 = vmax.xlane.f32.xlu0 %v1535
        %v1596 = vpop.xlane.xlu0 %1595
        %1597 = vmax.xlane.f32.xlu0 %v1540
        %v1598 = vpop.xlane.xlu0 %1597
        %1599 = vmax.xlane.f32.xlu0 %v1545
        %v1600 = vpop.xlane.xlu0 %1599
        %1601 = vmax.xlane.f32.xlu0 %v1550
        %v1602 = vpop.xlane.xlu0 %1601
        %1603 = vmax.xlane.f32.xlu0 %v1555
        %v1604 = vpop.xlane.xlu0 %1603
        %1605 = vmax.xlane.f32.xlu0 %v1560
        %v1606 = vpop.xlane.xlu0 %1605
        %1607 = vmax.xlane.f32.xlu0 %v1565
        %v1608 = vpop.xlane.xlu0 %1607
        %1609 = vmax.xlane.f32.xlu0 %v1570
        %v1610 = vpop.xlane.xlu0 %1609
        %1611 = vmax.xlane.f32.xlu0 %v1575
        %v1612 = vpop.xlane.xlu0 %1611
        %1613 = vmax.xlane.f32.xlu0 %v1580
        %v1614 = vpop.xlane.xlu0 %1613
        %v1615 = vsub.f32 %v1505, %v1584
        %v1616 = vsub.f32 %v1510, %v1586
        %v1617 = vsub.f32 %v1515, %v1588
        %v1618 = vsub.f32 %v1520, %v1590
        %v1619 = vsub.f32 %v1525, %v1592
        %v1620 = vsub.f32 %v1530, %v1594
        %v1621 = vsub.f32 %v1535, %v1596
        %v1622 = vsub.f32 %v1540, %v1598
        %v1623 = vsub.f32 %v1545, %v1600
        %v1624 = vsub.f32 %v1550, %v1602
        %v1625 = vsub.f32 %v1555, %v1604
        %v1626 = vsub.f32 %v1560, %v1606
        %v1627 = vsub.f32 %v1565, %v1608
        %v1628 = vsub.f32 %v1570, %v1610
        %v1629 = vsub.f32 %v1575, %v1612
        %v1630 = vsub.f32 %v1580, %v1614
        %v1631 = vmul.f32 %v1615, 1.442695
        %v1632 = vpow.pop %v1631
        %v1633 = vmul.f32 %v1616, 1.442695
        %v1634 = vpow.pop %v1633
        %v1635 = vmul.f32 %v1617, 1.442695
        %v1636 = vpow.pop %v1635
        %v1637 = vmul.f32 %v1618, 1.442695
        %v1638 = vpow.pop %v1637
        %v1639 = vmul.f32 %v1619, 1.442695
        %v1640 = vpow.pop %v1639
        %v1641 = vmul.f32 %v1620, 1.442695
        %v1642 = vpow.pop %v1641
        %v1643 = vmul.f32 %v1621, 1.442695
        %v1644 = vpow.pop %v1643
        %v1645 = vmul.f32 %v1622, 1.442695
        %v1646 = vpow.pop %v1645
        %v1647 = vmul.f32 %v1623, 1.442695
        %v1648 = vpow.pop %v1647
        %v1649 = vmul.f32 %v1624, 1.442695
        %v1650 = vpow.pop %v1649
        %v1651 = vmul.f32 %v1625, 1.442695
        %v1652 = vpow.pop %v1651
        %v1653 = vmul.f32 %v1626, 1.442695
        %v1654 = vpow.pop %v1653
        %v1655 = vmul.f32 %v1627, 1.442695
        %v1656 = vpow.pop %v1655
        %v1657 = vmul.f32 %v1628, 1.442695
        %v1658 = vpow.pop %v1657
        %v1659 = vmul.f32 %v1629, 1.442695
        %v1660 = vpow.pop %v1659
        %v1661 = vmul.f32 %v1630, 1.442695
        %v1662 = vpow.pop %v1661
        %1663 = vadd.xlane.f32.xlu0 %v1632
        %v1664 = vpop.xlane.xlu0 %1663
        %1665 = vadd.xlane.f32.xlu0 %v1634
        %v1666 = vpop.xlane.xlu0 %1665
        %1667 = vadd.xlane.f32.xlu0 %v1636
        %v1668 = vpop.xlane.xlu0 %1667
        %1669 = vadd.xlane.f32.xlu0 %v1638
        %v1670 = vpop.xlane.xlu0 %1669
        %1671 = vadd.xlane.f32.xlu0 %v1640
        %v1672 = vpop.xlane.xlu0 %1671
        %1673 = vadd.xlane.f32.xlu0 %v1642
        %v1674 = vpop.xlane.xlu0 %1673
        %1675 = vadd.xlane.f32.xlu0 %v1644
        %v1676 = vpop.xlane.xlu0 %1675
        %1677 = vadd.xlane.f32.xlu0 %v1646
        %v1678 = vpop.xlane.xlu0 %1677
        %1679 = vadd.xlane.f32.xlu0 %v1648
        %v1680 = vpop.xlane.xlu0 %1679
        %1681 = vadd.xlane.f32.xlu0 %v1650
        %v1682 = vpop.xlane.xlu0 %1681
        %1683 = vadd.xlane.f32.xlu0 %v1652
        %v1684 = vpop.xlane.xlu0 %1683
        %1685 = vadd.xlane.f32.xlu0 %v1654
        %v1686 = vpop.xlane.xlu0 %1685
        %1687 = vadd.xlane.f32.xlu0 %v1656
        %v1688 = vpop.xlane.xlu0 %1687
        %1689 = vadd.xlane.f32.xlu0 %v1658
        %v1690 = vpop.xlane.xlu0 %1689
        %1691 = vadd.xlane.f32.xlu0 %v1660
        %v1692 = vpop.xlane.xlu0 %1691
        %1693 = vadd.xlane.f32.xlu0 %v1662
        %v1694 = vpop.xlane.xlu0 %1693
        %v1695 = vrcp.pop %v1664
        %v1696 = vrcp.pop %v1666
        %v1697 = vrcp.pop %v1668
        %v1698 = vrcp.pop %v1670
        %v1699 = vrcp.pop %v1672
        %v1700 = vrcp.pop %v1674
        %v1701 = vrcp.pop %v1676
        %v1702 = vrcp.pop %v1678
        %v1703 = vrcp.pop %v1680
        %v1704 = vrcp.pop %v1682
        %v1705 = vrcp.pop %v1684
        %v1706 = vrcp.pop %v1686
        %v1707 = vrcp.pop %v1688
        %v1708 = vrcp.pop %v1690
        %v1709 = vrcp.pop %v1692
        %v1710 = vrcp.pop %v1694
        %v1711 = vmul.f32 %v1664, %v1695
        %v1712 = vmul.f32 %v1666, %v1696
        %v1713 = vmul.f32 %v1668, %v1697
        %v1714 = vmul.f32 %v1670, %v1698
        %v1715 = vmul.f32 %v1672, %v1699
        %v1716 = vmul.f32 %v1674, %v1700
        %v1717 = vmul.f32 %v1676, %v1701
        %v1718 = vmul.f32 %v1678, %v1702
        %v1719 = vmul.f32 %v1680, %v1703
        %v1720 = vmul.f32 %v1682, %v1704
        %v1721 = vmul.f32 %v1684, %v1705
        %v1722 = vmul.f32 %v1686, %v1706
        %v1723 = vmul.f32 %v1688, %v1707
        %v1724 = vmul.f32 %v1690, %v1708
        %v1725 = vmul.f32 %v1692, %v1709
        %v1726 = vmul.f32 %v1694, %v1710
        %v1727 = vsub.f32 2.0, %v1711
        %v1728 = vsub.f32 2.0, %v1712
        %v1729 = vsub.f32 2.0, %v1713
        %v1730 = vsub.f32 2.0, %v1714
        %v1731 = vsub.f32 2.0, %v1715
        %v1732 = vsub.f32 2.0, %v1716
        %v1733 = vsub.f32 2.0, %v1717
        %v1734 = vsub.f32 2.0, %v1718
        %v1735 = vsub.f32 2.0, %v1719
        %v1736 = vsub.f32 2.0, %v1720
        %v1737 = vsub.f32 2.0, %v1721
        %v1738 = vsub.f32 2.0, %v1722
        %v1739 = vsub.f32 2.0, %v1723
        %v1740 = vsub.f32 2.0, %v1724
        %v1741 = vsub.f32 2.0, %v1725
        %v1742 = vsub.f32 2.0, %v1726
        %v1743 = vmul.f32 %v1695, %v1727
        %v1744 = vmul.f32 %v1696, %v1728
        %v1745 = vmul.f32 %v1697, %v1729
        %v1746 = vmul.f32 %v1698, %v1730
        %v1747 = vmul.f32 %v1699, %v1731
        %v1748 = vmul.f32 %v1700, %v1732
        %v1749 = vmul.f32 %v1701, %v1733
        %v1750 = vmul.f32 %v1702, %v1734
        %v1751 = vmul.f32 %v1703, %v1735
        %v1752 = vmul.f32 %v1704, %v1736
        %v1753 = vmul.f32 %v1705, %v1737
        %v1754 = vmul.f32 %v1706, %v1738
        %v1755 = vmul.f32 %v1707, %v1739
        %v1756 = vmul.f32 %v1708, %v1740
        %v1757 = vmul.f32 %v1709, %v1741
        %v1758 = vmul.f32 %v1710, %v1742
        %v1759 = vmul.f32 %v1632, %v1743
        %v1760 = vmul.f32 %v1634, %v1744
        %v1761 = vmul.f32 %v1636, %v1745
        %v1762 = vmul.f32 %v1638, %v1746
        %v1763 = vmul.f32 %v1640, %v1747
        %v1764 = vmul.f32 %v1642, %v1748
        %v1765 = vmul.f32 %v1644, %v1749
        %v1766 = vmul.f32 %v1646, %v1750
        %v1767 = vmul.f32 %v1648, %v1751
        %v1768 = vmul.f32 %v1650, %v1752
        %v1769 = vmul.f32 %v1652, %v1753
        %v1770 = vmul.f32 %v1654, %v1754
        %v1771 = vmul.f32 %v1656, %v1755
        %v1772 = vmul.f32 %v1658, %v1756
        %v1773 = vmul.f32 %v1660, %v1757
        %v1774 = vmul.f32 %v1662, %v1758
        %1775 = vst [vmem:[%s286] sm:$0xff] %v1759
        %1776 = vst [vmem:[%s286 + $0x8] sm:$0xff] %v1760
        %1777 = vst [vmem:[%s286 + $0x10] sm:$0xff] %v1761
        %1778 = vst [vmem:[%s286 + $0x18] sm:$0xff] %v1762
        %1779 = vst [vmem:[%s286 + $0x20] sm:$0xff] %v1763
        %1780 = vst [vmem:[%s286 + $0x28] sm:$0xff] %v1764
        %1781 = vst [vmem:[%s286 + $0x30] sm:$0xff] %v1765
        %1782 = vst [vmem:[%s286 + $0x38] sm:$0xff] %v1766
        %1783 = vst [vmem:[%s286 + $0x40] sm:$0xff] %v1767
        %1784 = vst [vmem:[%s286 + $0x48] sm:$0xff] %v1768
        %1785 = vst [vmem:[%s286 + $0x50] sm:$0xff] %v1769
        %1786 = vst [vmem:[%s286 + $0x58] sm:$0xff] %v1770
        %1787 = vst [vmem:[%s286 + $0x60] sm:$0xff] %v1771
        %1788 = vst [vmem:[%s286 + $0x68] sm:$0xff] %v1772
        %1789 = vst [vmem:[%s286 + $0x70] sm:$0xff] %v1773
        %1790 = vst [vmem:[%s286 + $0x78] sm:$0xff] %v1774
        %s1791 = sand.u32 %s142, 1
        %s1792 = scalar_lea.sflag [#allocation4], %s1791
        %s1793 = sand.u32 %s142, 1
        %s1794 = smul.addr %s1793, 128
        %s1795 = scalar_lea.vmem [#allocation10], %s1794
        // Predicated region
        $region57: #{tpu_custom_call.1} parent=39 // pred_check
          %p1796 = pneg %p152
        $region58: #{tpu_custom_call.1} parent=39 // pred_check_branch
          %1798 = sbr.rel (%p1796) target = $region60
        $region59: #{tpu_custom_call.1} parent=39 // pred_region
          %s1799 = smul.u32 16, %s24
          %s1801 = ssub.s32 2048, 2048
          %1802 = vsyncadd %s1792, %s1801
          %s1803 = smul.addr %s1799, 128
          %s1804 = scalar_lea.hbm %s5, %s1803
          %s1805 = sshll.u32 %s1795, 4
          %s1806 = int_to_ptr.vmem [resolvable:$true] %s1805
          %1811 = dma.vmem_to_hbm [thread:$0]  %s1806, 2048, %s1804, %s1792, 128, 128, 8
        $region60: #{tpu_custom_call.1} parent=39 // pred_fallthru
          _
      $region40: #{tpu_custom_call.1} parent=5 // pred_fallthru
        _
      %p1812 = scmp.le.s32.totalorder 2, %s19
      // Predicated region
      $region61: #{tpu_custom_call.1} parent=5 // pred_check
        %p1813 = pneg %p1812
      $region62: #{tpu_custom_call.1} parent=5 // pred_check_branch
        %1815 = sbr.rel (%p1813) target = $region64
      $region63: #{tpu_custom_call.1} parent=5 // pred_region
        %s1816 = ssub.s32 %s19, 2
        // Predicated region
        $region65: #{tpu_custom_call.1} parent=63 // pred_check
          %p1817 = pneg %p158
        $region66: #{tpu_custom_call.1} parent=63 // pred_check_branch
          %1819 = sbr.rel (%p1817) target = $region68
        $region67: #{tpu_custom_call.1} parent=63 // pred_region
          %s1820 = sand.u32 %s143, 1
          %s1821 = scalar_lea.sflag [#allocation4], %s1820
          %s1822 = sand.u32 %s143, 1
          %s1823 = smul.addr %s1822, 128
          %s1824 = scalar_lea.vmem [#allocation10], %s1823
          %1825 = dma.done %s1821, 2048
        $region68: #{tpu_custom_call.1} parent=63 // pred_fallthru
          _
      $region64: #{tpu_custom_call.1} parent=5 // pred_fallthru
        _
    $region6: #{tpu_custom_call.1} parent=1 // loop_footer
      %s23 = sadd.s32 1, %s19
    $region7: #{tpu_custom_call.1} parent=1 // loop_footer_branch
      %18 = sbr.rel target = $region3
    $region8: #{tpu_custom_call.1} parent=1 // loop_exit
      _
    %1826 = vsyncpa [#allocation3], 1
    %s1827 = scalar_lea.sflag [#allocation3], 1
    %1828 = vsyncpa %s1827, 1
    %1829 = vsyncpa [#allocation6], 1
    %1830 = vsyncpa [#allocation9], 1
    %1831 = vsyncpa [#allocation4], 1
    %s1832 = scalar_lea.sflag [#allocation4], 1
    %1833 = vsyncpa %s1832, 1

</llo_original>
